<compile_context>
chip_gen: v7x
topology: tpu7x:2x2x1
jax: 0.10.0
libtpu: 0.0.40
codegen_flags: <defaults>
</compile_context>

<pallas_src>
import jax
import jax.numpy as jnp
import numpy as np
from jax.experimental import pallas as pl
from jax.experimental.pallas import tpu as pltpu

# ---- small, module-consistent shapes ----
B = 2                  # batch
H = W = 16             # spatial (scaled down from 224)
C_RGB, C_TH = 3, 1     # input channels per modality
D = 128                # feature_dim (scaled down from 512)
CBF = 128              # backbone feature dim (scaled down from resnet18's 512)
NUM_CLASSES = 5
NUM_HEADS = 8
HEAD_DIM = D // NUM_HEADS
NUM_MOD = 2
NT = NUM_MOD * B       # number of modality tokens (rows): [rgb@b0, rgb@b1, th@b0, th@b1]
KH = KW = 3
STRIDE = 2
OH = OW = H // STRIDE
P = B * OH * OW        # im2col rows per modality (= 128)
KPAD = 32              # padded im2col K per modality (27+1 bias col -> 32, 9+1 -> 32)

# ---- packed-slab lane offsets (shared by pack_params and the kernel) ----
# W_TALL slab: (2*CBF, 512)
T_WC, T_WP, T_WG1, T_WF1 = 0, 128, 256, 384
# W_D slab: (D, 896)
D_WQKV, D_WO, D_WF2, D_WCLS, D_HH = 0, 384, 512, 640, 768
# ROWS slab: (NT, 1536)
R_AVG, R_BP, R_BG1, R_WG2, R_BQKV, R_BO, R_BF1, R_BF2, R_BCLS = (
    0, 256, 384, 512, 640, 1024, 1152, 1280, 1408)
ROWS_LANES = 1536


# ---------------------------------------------------------------------------
# The fused kernel: conv stems + GAP + projectors + gates + 8-head attention +
# fusion MLP + classifier, all on 2-D lane-dense slabs.
# ---------------------------------------------------------------------------
def _fused_kernel(patch_ref, wt_ref, wd_ref, rows_ref, out_ref):
    f32 = jnp.float32

    # ---- both conv stems as ONE block-diagonal GEMM (bias folded via ones-column) ----
    wc = wt_ref[0:2 * KPAD, T_WC:T_WC + CBF]                              # (64, 128)
    conv = jnp.maximum(
        jnp.dot(patch_ref[...], wc, preferred_element_type=f32), 0.0)    # (2P, CBF)

    # ---- global average pool = one matmul with the precomputed (NT, 2P) averaging matrix ----
    pooled = jnp.dot(rows_ref[:, R_AVG:R_AVG + NUM_MOD * P], conv,
                     preferred_element_type=f32)                         # (NT, CBF)

    row = jax.lax.broadcasted_iota(jnp.int32, (NT, 1), 0)
    m_rgb = (row < B).astype(f32)                                         # modality-0 rows
    m_th = 1.0 - m_rgb

    # ---- per-modality feature projector: masked lane-concat + one GEMM ----
    pooled_wide = jnp.concatenate([pooled * m_rgb, pooled * m_th], axis=1)   # (NT, 2*CBF)
    feats = jnp.maximum(
        jnp.dot(pooled_wide, wt_ref[:, T_WP:T_WP + D], preferred_element_type=f32)
        + rows_ref[:, R_BP:R_BP + D], 0.0)                                # (NT, D)

    # ---- modality attention gates (2nd-layer bias folded into lane D//2 of the gate GEMM) ----
    feats_wide = jnp.concatenate([feats * m_rgb, feats * m_th], axis=1)
    hgate = jnp.maximum(
        jnp.dot(feats_wide, wt_ref[:, T_WG1:T_WG1 + D], preferred_element_type=f32)
        + rows_ref[:, R_BG1:R_BG1 + D], 0.0)                              # (NT, D)
    z = jnp.sum(hgate * rows_ref[:, R_WG2:R_WG2 + D], axis=-1, keepdims=True)   # (NT, 1)
    ez = jnp.exp(-jnp.abs(z))                                             # overflow-safe sigmoid
    inv = pl.reciprocal(1.0 + ez, approx=False)    # exact: the gate is returned to the caller
    gates = jnp.where(z >= 0.0, inv, ez * inv)                            # (NT, 1)
    x = feats * gates                                                     # attended tokens

    # ---- (NT,NT) token-swap permutation (row i -> same batch, other modality), built from iotas ----
    ri = jax.lax.broadcasted_iota(jnp.int32, (NT, NT), 0)
    ci = jax.lax.broadcasted_iota(jnp.int32, (NT, NT), 1)
    rj = ri + B
    rj = jnp.where(rj >= NT, rj - NT, rj)
    swap = (rj == ci).astype(f32)

    # ---- 8-head self-attention over the 2-token modality sequence ----
    qkv = (jnp.dot(x, wd_ref[:, D_WQKV:D_WQKV + 3 * D], preferred_element_type=f32)
           + rows_ref[:, R_BQKV:R_BQKV + 3 * D])                          # (NT, 3D)
    q = qkv[:, 0:D]
    kv = qkv[:, D:3 * D]                                                  # [K | V]
    kv_o = jnp.dot(swap, kv, preferred_element_type=f32)                  # other token's [K | V]
    k, v = kv[:, 0:D], kv[:, D:2 * D]
    k_o, v_o = kv_o[:, 0:D], kv_o[:, D:2 * D]

    # block-diagonal head reducer+broadcaster, pre-scaled by 1/sqrt(HEAD_DIM)
    hh = wd_ref[:, D_HH:D_HH + D]                                         # (D, D)
    s_self = jnp.dot(q * k, hh, preferred_element_type=f32)               # (NT, D) per-lane head scores
    s_cross = jnp.dot(q * k_o, hh, preferred_element_type=f32)
    mx = jnp.maximum(s_self, s_cross)                                     # 2-key softmax
    e_self = jnp.exp(s_self - mx)
    e_cross = jnp.exp(s_cross - mx)
    r = pl.reciprocal(e_self + e_cross, approx=True)
    attn = (e_self * r) * v + (e_cross * r) * v_o                         # (NT, D)
    o = (jnp.dot(attn, wd_ref[:, D_WO:D_WO + D], preferred_element_type=f32)
         + rows_ref[:, R_BO:R_BO + D])

    # ---- fusion MLP on concat([own token, other token]) + classifier ----
    o_other = jnp.dot(swap, o, preferred_element_type=f32)
    wide = jnp.concatenate([o, o_other], axis=1)                          # rows 0..B-1 = [tok0 | tok1]
    hidden = jnp.maximum(
        jnp.dot(wide, wt_ref[:, T_WF1:T_WF1 + D], preferred_element_type=f32)
        + rows_ref[:, R_BF1:R_BF1 + D], 0.0)
    fused = (jnp.dot(hidden, wd_ref[:, D_WF2:D_WF2 + D], preferred_element_type=f32)
             + rows_ref[:, R_BF2:R_BF2 + D])

    # ---- lane-dense (NT, D) output slab: lanes [0,NC) logits, lane NC = own-modality gate ----
    slab = (jnp.dot(fused, wd_ref[:, D_WCLS:D_WCLS + D], preferred_element_type=f32)
            + rows_ref[:, R_BCLS:R_BCLS + D])
    lane = jax.lax.broadcasted_iota(jnp.int32, (1, D), 1)
    out_ref[...] = slab + jnp.where(lane == NUM_CLASSES, gates, 0.0)      # full-slab unmasked store


# ---------------------------------------------------------------------------
# Input-dependent glue (stays in the jitted forward): im2col patches
# ---------------------------------------------------------------------------
def extract_patches(x_nchw):
    """NCHW image -> (B*OH*OW, C*KH*KW) im2col matrix for a 3x3/stride2/pad1 conv."""
    b, c, h, w = x_nchw.shape
    xp = jnp.pad(x_nchw, ((0, 0), (0, 0), (1, 1), (1, 1)))
    cols = []
    for dh in range(KH):
        for dw in range(KW):
            cols.append(xp[:, :, dh:dh + h:STRIDE, dw:dw + w:STRIDE])     # (B, C, OH, OW)
    p = jnp.stack(cols, axis=2)                                           # (B, C, KH*KW, OH, OW)
    p = jnp.transpose(p, (0, 3, 4, 1, 2)).reshape(b * OH * OW, c * KH * KW)
    return p


def _build_patches(rgb, thermal):
    """Block-diagonal (2P, 2*KPAD) im2col slab; last column of each 32-block is 1.0 (bias trick)."""
    pr = extract_patches(rgb)        # (P, 27)
    pt = extract_patches(thermal)    # (P, 9)
    ones = jnp.ones((P, 1), jnp.float32)
    pr = jnp.concatenate(
        [pr, jnp.zeros((P, KPAD - 1 - pr.shape[1]), jnp.float32), ones], axis=1)   # (P, 32)
    pt = jnp.concatenate(
        [pt, jnp.zeros((P, KPAD - 1 - pt.shape[1]), jnp.float32), ones], axis=1)   # (P, 32)
    z = jnp.zeros((P, KPAD), jnp.float32)
    return jnp.concatenate(
        [jnp.concatenate([pr, z], axis=1),
         jnp.concatenate([z, pt], axis=1)], axis=0)                                # (2P, 64)


# ---------------------------------------------------------------------------
# One-time parameter packing (hoisted out of the per-call path)
# ---------------------------------------------------------------------------
def pack_params(p):
    f32 = jnp.float32

    def rows2(a, b):
        """Per-modality (1, X) params -> (NT, X) matching the token-row layout."""
        return jnp.concatenate([jnp.tile(a, (B, 1)), jnp.tile(b, (B, 1))], axis=0)

    # --- W_TALL (2*CBF, 512): conv stems | projector | gate layer 1 | fusion layer 1 ---
    wc_blk = jnp.zeros((2 * CBF, CBF), f32)
    wc_blk = wc_blk.at[0:C_RGB * KH * KW, :].set(p['rgb_wc'])
    wc_blk = wc_blk.at[KPAD - 1:KPAD, :].set(p['rgb_bc'])          # ones-column bias row (RGB)
    wc_blk = wc_blk.at[KPAD:KPAD + C_TH * KH * KW, :].set(p['th_wc'])
    wc_blk = wc_blk.at[2 * KPAD - 1:2 * KPAD, :].set(p['th_bc'])   # ones-column bias row (thermal)
    wp_blk = jnp.concatenate([p['rgb_wp'], p['th_wp']], axis=0)    # (2*CBF, D)
    wg1_blk = jnp.zeros((2 * D, D), f32)
    wg1_blk = wg1_blk.at[:, 0:D // 2].set(jnp.concatenate([p['w0a'], p['w1a']], axis=0))
    w_tall = jnp.concatenate([wc_blk, wp_blk, wg1_blk, p['wf1']], axis=1)          # (256, 512)

    # --- W_D (D, 896): wqkv | wo | wf2 | wcls(pad) | HH (pre-scaled block-diag head matrix) ---
    d_idx = np.arange(D) // HEAD_DIM
    hh = (d_idx[:, None] == d_idx[None, :]).astype(np.float32) / np.sqrt(HEAD_DIM)
    wqkv = jnp.concatenate([p['wq'], p['wk'], p['wv']], axis=1)                    # (D, 3D)
    wcls_pad = jnp.pad(p['wcls'], ((0, 0), (0, D - NUM_CLASSES)))                  # (D, D)
    w_d = jnp.concatenate([wqkv, p['wo'], p['wf2'], wcls_pad, jnp.asarray(hh)], axis=1)  # (128, 896)

    # --- ROWS (NT, 1536): avg-pool matrix + every per-token row constant / bias ---
    r_idx = np.arange(NUM_MOD * P)
    t_idx = np.arange(NT)
    avg = ((r_idx[None, :] // (OH * OW)) == t_idx[:, None]).astype(np.float32) / (OH * OW)  # (NT, 2P)
    bp_rows = rows2(p['rgb_bp'], p['th_bp'])                                       # (NT, D)
    bg1_blk = jnp.zeros((NT, D), f32)
    bg1_blk = bg1_blk.at[:, 0:D // 2].set(rows2(p['b0a'], p['b1a']))
    bg1_blk = bg1_blk.at[:, D // 2].set(1.0)                                       # bias-fold lane
    wg2_blk = jnp.zeros((NT, D), f32)
    wg2_blk = wg2_blk.at[:, 0:D // 2].set(rows2(p['w0b'].T, p['w1b'].T))
    wg2_blk = wg2_blk.at[:, D // 2].set(rows2(p['b0b'], p['b1b'])[:, 0])           # folded 2nd-layer bias
    bqkv_rows = jnp.tile(jnp.concatenate([p['bq'], p['bk'], p['bv']], axis=1), (NT, 1))
    bo_rows = jnp.tile(p['bo'], (NT, 1))
    bf1_rows = jnp.tile(p['bf1'], (NT, 1))
    bf2_rows = jnp.tile(p['bf2'], (NT, 1))
    bcls_rows = jnp.tile(jnp.pad(p['bcls'], ((0, 0), (0, D - NUM_CLASSES))), (NT, 1))
    rows = jnp.concatenate([jnp.asarray(avg), bp_rows, bg1_blk, wg2_blk,
                            bqkv_rows, bo_rows, bf1_rows, bf2_rows, bcls_rows], axis=1)
    assert rows.shape == (NT, ROWS_LANES)

    return {'w_tall': w_tall, 'w_d': w_d, 'rows': rows}


@jax.jit
def model_forward(rgb, thermal, packed):
    patches = _build_patches(rgb, thermal)
    out = pl.pallas_call(
        _fused_kernel,
        out_shape=jax.ShapeDtypeStruct((NT, D), jnp.float32),
        in_specs=[pl.BlockSpec(memory_space=pltpu.MemorySpace.VMEM)] * 4,
        out_specs=pl.BlockSpec(memory_space=pltpu.MemorySpace.VMEM),
    )(patches, packed['w_tall'], packed['w_d'], packed['rows'])
    logits = out[:B, :NUM_CLASSES]
    # lane NUM_CLASSES of row t holds token t's own gate; rows ordered (modality, batch)
    attnw = out[:, NUM_CLASSES].reshape(NUM_MOD, B).T.reshape(B, NUM_MOD, 1)
    return logits, attnw


# ---------------------------------------------------------------------------
# Parameters (natural per-module layout)
# ---------------------------------------------------------------------------
def init_params(key):
    keys = iter(jax.random.split(key, 48))

    def nrm(shape, scale=0.1):
        return jax.random.normal(next(keys), shape, dtype=jnp.float32) * scale

    p = {}
    # branch backbones (conv stem) + feature projectors
    p['rgb_wc'] = nrm((C_RGB * KH * KW, CBF)); p['rgb_bc'] = nrm((1, CBF))
    p['rgb_wp'] = nrm((CBF, D));               p['rgb_bp'] = nrm((1, D), 0.02)
    p['th_wc'] = nrm((C_TH * KH * KW, CBF));   p['th_bc'] = nrm((1, CBF))
    p['th_wp'] = nrm((CBF, D));                p['th_bp'] = nrm((1, D), 0.02)
    # modality attention gates
    p['w0a'] = nrm((D, D // 2)); p['b0a'] = nrm((1, D // 2), 0.02)
    p['w0b'] = nrm((D // 2, 1)); p['b0b'] = nrm((1, 1), 0.02)
    p['w1a'] = nrm((D, D // 2)); p['b1a'] = nrm((1, D // 2), 0.02)
    p['w1b'] = nrm((D // 2, 1)); p['b1b'] = nrm((1, 1), 0.02)
    # multi-head self attention (q/k/v/out projections)
    p['wq'] = nrm((D, D)); p['bq'] = nrm((1, D), 0.02)
    p['wk'] = nrm((D, D)); p['bk'] = nrm((1, D), 0.02)
    p['wv'] = nrm((D, D)); p['bv'] = nrm((1, D), 0.02)
    p['wo'] = nrm((D, D)); p['bo'] = nrm((1, D), 0.02)
    # fusion layer: Linear(2D -> D) then Linear(D -> D)
    p['wf1'] = nrm((2 * D, D)); p['bf1'] = nrm((1, D), 0.02)
    p['wf2'] = nrm((D, D));     p['bf2'] = nrm((1, D), 0.02)
    # classifier
    p['wcls'] = nrm((D, NUM_CLASSES)); p['bcls'] = nrm((1, NUM_CLASSES), 0.02)
    return p


# ---------------------------------------------------------------------------
# Pure-JAX reference (same parameterization) for a correctness check
# ---------------------------------------------------------------------------
def reference_forward(rgb, thermal, p):
    def branch(x, wc, bc, wp, bp):
        patches = extract_patches(x)
        conv = jnp.maximum(patches @ wc + bc, 0.0)            # (P, CBF)
        pooled = conv.reshape(B, OH * OW, CBF).mean(axis=1)   # (B, CBF) global avg pool
        return jnp.maximum(pooled @ wp + bp, 0.0)

    f0 = branch(rgb, p['rgb_wc'], p['rgb_bc'], p['rgb_wp'], p['rgb_bp'])
    f1 = branch(thermal, p['th_wc'], p['th_bc'], p['th_wp'], p['th_bp'])

    def gate(f, wa, ba, wb, bb):
        h = jnp.maximum(f @ wa + ba, 0.0)
        return jax.nn.sigmoid(h @ wb + bb)

    a0 = gate(f0, p['w0a'], p['b0a'], p['w0b'], p['b0b'])
    a1 = gate(f1, p['w1a'], p['b1a'], p['w1b'], p['b1b'])
    x = jnp.stack([f0 * a0, f1 * a1], axis=1)                 # (B, 2, D)

    q = x @ p['wq'] + p['bq']; k = x @ p['wk'] + p['bk']; v = x @ p['wv'] + p['bv']

    def heads(t):
        return t.reshape(B, 2, NUM_HEADS, HEAD_DIM).transpose(0, 2, 1, 3)

    qh, kh, vh = heads(q), heads(k), heads(v)
    scores = jnp.einsum('bhid,bhjd->bhij', qh, kh) / (HEAD_DIM ** 0.5)
    aw = jax.nn.softmax(scores, axis=-1)
    out = jnp.einsum('bhij,bhjd->bhid', aw, vh).transpose(0, 2, 1, 3).reshape(B, 2, D)
    out = out @ p['wo'] + p['bo']

    concat = out.reshape(B, 2 * D)
    hidden = jnp.maximum(concat @ p['wf1'] + p['bf1'], 0.0)
    fused = hidden @ p['wf2'] + p['bf2']
    logits = fused @ p['wcls'] + p['bcls']
    attnw = jnp.stack([a0, a1], axis=1)                       # (B, 2, 1)
    return logits, attnw


if __name__ == "__main__":
    key = jax.random.PRNGKey(0)
    k_param, k_rgb, k_th = jax.random.split(key, 3)
    params = init_params(k_param)
    packed = pack_params(params)    # one-time packing, hoisted out of the forward path

    rgb_images = jax.random.normal(k_rgb, (B, C_RGB, H, W), dtype=jnp.float32)      # NCHW
    thermal_images = jax.random.normal(k_th, (B, C_TH, H, W), dtype=jnp.float32)    # NCHW

    logits, attn_weights = model_forward(rgb_images, thermal_images, packed)
    jax.block_until_ready((logits, attn_weights))

    ref_logits, ref_attn = reference_forward(rgb_images, thermal_images, params)
    # Tolerance accounts for the EUP approximate-reciprocal in the 2-key softmax normalization.
    np.testing.assert_allclose(np.asarray(logits), np.asarray(ref_logits), rtol=5e-3, atol=5e-3)
    np.testing.assert_allclose(np.asarray(attn_weights), np.asarray(ref_attn), rtol=5e-3, atol=5e-3)

    print("KERNEL_OK")
</pallas_src>

<mosaic_0001>
module attributes {stable_mosaic.version = 11 : i64} {
  func.func @_fused_kernel(%arg0: memref<256x64xf32, #tpu.memory_space<vmem>>, %arg1: memref<256x512xf32, #tpu.memory_space<vmem>>, %arg2: memref<128x896xf32, #tpu.memory_space<vmem>>, %arg3: memref<4x1536xf32, #tpu.memory_space<vmem>>, %arg4: memref<4x128xf32, #tpu.memory_space<vmem>>) attributes {dimension_semantics = [], scalar_prefetch = 0 : i64, scratch_operands = 0 : i64, tpu.core_type = #tpu.core_type<tc>} {
    %c0 = arith.constant 0 : index
    %c0_0 = arith.constant 0 : index
    %0 = vector.load %arg1[%c0, %c0_0] : memref<256x512xf32, #tpu.memory_space<vmem>>, vector<64x128xf32>
    %c0_1 = arith.constant 0 : index
    %c0_2 = arith.constant 0 : index
    %1 = vector.load %arg0[%c0_1, %c0_2] : memref<256x64xf32, #tpu.memory_space<vmem>>, vector<256x64xf32>
    %cst = arith.constant dense<0.000000e+00> : vector<256x128xf32>
    %2 = tpu.matmul %1, %0, %cst {dimension_numbers = #tpu.dot_dimension_numbers<[1], [0], [0], [1], [0, 0, 1, 1], [], []>} : vector<256x64xf32>, vector<64x128xf32>, vector<256x128xf32> -> vector<256x128xf32>
    %cst_3 = arith.constant 0.000000e+00 : f32
    %3 = vector.broadcast %cst_3 : f32 to vector<256x128xf32>
    %4 = arith.maximumf %2, %3 : vector<256x128xf32>
    %c0_4 = arith.constant 0 : index
    %c0_5 = arith.constant 0 : index
    %5 = vector.load %arg3[%c0_4, %c0_5] : memref<4x1536xf32, #tpu.memory_space<vmem>>, vector<4x256xf32>
    %cst_6 = arith.constant dense<0.000000e+00> : vector<4x128xf32>
    %6 = tpu.matmul %5, %4, %cst_6 {dimension_numbers = #tpu.dot_dimension_numbers<[1], [0], [0], [1], [0, 0, 1, 1], [], []>} : vector<4x256xf32>, vector<256x128xf32>, vector<4x128xf32> -> vector<4x128xf32>
    %7 = tpu.iota {dimensions = array<i32: 0>} : vector<4x1xi32>
    %c2_i32 = arith.constant 2 : i32
    %8 = vector.broadcast %c2_i32 : i32 to vector<4x1xi32>
    %9 = arith.cmpi slt, %7, %8 : vector<4x1xi32>
    %10 = arith.extui %9 : vector<4x1xi1> to vector<4x1xi32>
    %11 = arith.sitofp %10 : vector<4x1xi32> to vector<4x1xf32>
    %cst_7 = arith.constant 1.000000e+00 : f32
    %12 = vector.broadcast %cst_7 : f32 to vector<4x1xf32>
    %13 = arith.subf %12, %11 : vector<4x1xf32>
    %14 = vector.broadcast %11 : vector<4x1xf32> to vector<4x128xf32>
    %15 = arith.mulf %6, %14 : vector<4x128xf32>
    %16 = vector.broadcast %13 : vector<4x1xf32> to vector<4x128xf32>
    %17 = arith.mulf %6, %16 : vector<4x128xf32>
    %18 = tpu.concatenate %15, %17 in 1 : vector<4x128xf32>, vector<4x128xf32> -> vector<4x256xf32>
    %c0_8 = arith.constant 0 : index
    %c128 = arith.constant 128 : index
    %19 = vector.load %arg1[%c0_8, %c128] : memref<256x512xf32, #tpu.memory_space<vmem>>, vector<256x128xf32>
    %cst_9 = arith.constant dense<0.000000e+00> : vector<4x128xf32>
    %20 = tpu.matmul %18, %19, %cst_9 {dimension_numbers = #tpu.dot_dimension_numbers<[1], [0], [0], [1], [0, 0, 1, 1], [], []>} : vector<4x256xf32>, vector<256x128xf32>, vector<4x128xf32> -> vector<4x128xf32>
    %c0_10 = arith.constant 0 : index
    %c256 = arith.constant 256 : index
    %21 = vector.load %arg3[%c0_10, %c256] : memref<4x1536xf32, #tpu.memory_space<vmem>>, vector<4x128xf32>
    %22 = arith.addf %20, %21 : vector<4x128xf32>
    %cst_11 = arith.constant 0.000000e+00 : f32
    %23 = vector.broadcast %cst_11 : f32 to vector<4x128xf32>
    %24 = arith.maximumf %22, %23 : vector<4x128xf32>
    %25 = vector.broadcast %11 : vector<4x1xf32> to vector<4x128xf32>
    %26 = arith.mulf %24, %25 : vector<4x128xf32>
    %27 = vector.broadcast %13 : vector<4x1xf32> to vector<4x128xf32>
    %28 = arith.mulf %24, %27 : vector<4x128xf32>
    %29 = tpu.concatenate %26, %28 in 1 : vector<4x128xf32>, vector<4x128xf32> -> vector<4x256xf32>
    %c0_12 = arith.constant 0 : index
    %c256_13 = arith.constant 256 : index
    %30 = vector.load %arg1[%c0_12, %c256_13] : memref<256x512xf32, #tpu.memory_space<vmem>>, vector<256x128xf32>
    %cst_14 = arith.constant dense<0.000000e+00> : vector<4x128xf32>
    %31 = tpu.matmul %29, %30, %cst_14 {dimension_numbers = #tpu.dot_dimension_numbers<[1], [0], [0], [1], [0, 0, 1, 1], [], []>} : vector<4x256xf32>, vector<256x128xf32>, vector<4x128xf32> -> vector<4x128xf32>
    %c0_15 = arith.constant 0 : index
    %c384 = arith.constant 384 : index
    %32 = vector.load %arg3[%c0_15, %c384] : memref<4x1536xf32, #tpu.memory_space<vmem>>, vector<4x128xf32>
    %33 = arith.addf %31, %32 : vector<4x128xf32>
    %cst_16 = arith.constant 0.000000e+00 : f32
    %34 = vector.broadcast %cst_16 : f32 to vector<4x128xf32>
    %35 = arith.maximumf %33, %34 : vector<4x128xf32>
    %c0_17 = arith.constant 0 : index
    %c512 = arith.constant 512 : index
    %36 = vector.load %arg3[%c0_17, %c512] : memref<4x1536xf32, #tpu.memory_space<vmem>>, vector<4x128xf32>
    %37 = arith.mulf %35, %36 : vector<4x128xf32>
    %cst_18 = arith.constant dense<0.000000e+00> : vector<4xf32>
    %38 = vector.multi_reduction <add>, %37, %cst_18 [1] : vector<4x128xf32> to vector<4xf32>
    %39 = vector.shape_cast %38 : vector<4xf32> to vector<4x1xf32>
    %40 = math.absf %39 : vector<4x1xf32>
    %cst_19 = arith.constant 0.000000e+00 : f32
    %41 = vector.broadcast %cst_19 : f32 to vector<4x1xf32>
    %42 = arith.subf %41, %40 : vector<4x1xf32>
    %43 = math.exp %42 : vector<4x1xf32>
    %cst_20 = arith.constant 1.000000e+00 : f32
    %44 = vector.broadcast %cst_20 : f32 to vector<4x1xf32>
    %45 = arith.addf %44, %43 : vector<4x1xf32>
    %46 = tpu.reciprocal %45 : vector<4x1xf32> -> vector<4x1xf32>
    %cst_21 = arith.constant 0.000000e+00 : f32
    %47 = vector.broadcast %cst_21 : f32 to vector<4x1xf32>
    %48 = arith.cmpf oge, %39, %47 : vector<4x1xf32>
    %49 = arith.mulf %43, %46 : vector<4x1xf32>
    %50 = arith.select %48, %46, %49 : vector<4x1xi1>, vector<4x1xf32>
    %51 = vector.broadcast %50 : vector<4x1xf32> to vector<4x128xf32>
    %52 = arith.mulf %24, %51 : vector<4x128xf32>
    %53 = tpu.iota {dimensions = array<i32: 0>} : vector<4x4xi32>
    %54 = tpu.iota {dimensions = array<i32: 1>} : vector<4x4xi32>
    %c2_i32_22 = arith.constant 2 : i32
    %55 = vector.broadcast %c2_i32_22 : i32 to vector<4x4xi32>
    %56 = arith.addi %53, %55 : vector<4x4xi32>
    %c4_i32 = arith.constant 4 : i32
    %57 = vector.broadcast %c4_i32 : i32 to vector<4x4xi32>
    %58 = arith.cmpi sge, %56, %57 : vector<4x4xi32>
    %c4_i32_23 = arith.constant 4 : i32
    %59 = vector.broadcast %c4_i32_23 : i32 to vector<4x4xi32>
    %60 = arith.subi %56, %59 : vector<4x4xi32>
    %61 = arith.select %58, %60, %56 : vector<4x4xi1>, vector<4x4xi32>
    %62 = arith.cmpi eq, %61, %54 : vector<4x4xi32>
    %63 = arith.extui %62 : vector<4x4xi1> to vector<4x4xi32>
    %64 = arith.sitofp %63 : vector<4x4xi32> to vector<4x4xf32>
    %c0_24 = arith.constant 0 : index
    %c0_25 = arith.constant 0 : index
    %65 = vector.load %arg2[%c0_24, %c0_25] : memref<128x896xf32, #tpu.memory_space<vmem>>, vector<128x384xf32>
    %cst_26 = arith.constant dense<0.000000e+00> : vector<4x384xf32>
    %66 = tpu.matmul %52, %65, %cst_26 {dimension_numbers = #tpu.dot_dimension_numbers<[1], [0], [0], [1], [0, 0, 1, 1], [], []>} : vector<4x128xf32>, vector<128x384xf32>, vector<4x384xf32> -> vector<4x384xf32>
    %c0_27 = arith.constant 0 : index
    %c640 = arith.constant 640 : index
    %67 = vector.load %arg3[%c0_27, %c640] : memref<4x1536xf32, #tpu.memory_space<vmem>>, vector<4x384xf32>
    %68 = arith.addf %66, %67 : vector<4x384xf32>
    %69 = vector.extract_strided_slice %68 {offsets = [0, 0], sizes = [4, 128], strides = [1, 1]} : vector<4x384xf32> to vector<4x128xf32>
    %70 = vector.extract_strided_slice %68 {offsets = [0, 128], sizes = [4, 256], strides = [1, 1]} : vector<4x384xf32> to vector<4x256xf32>
    %cst_28 = arith.constant dense<0.000000e+00> : vector<4x256xf32>
    %71 = tpu.matmul %64, %70, %cst_28 {dimension_numbers = #tpu.dot_dimension_numbers<[1], [0], [0], [1], [0, 0, 1, 1], [], []>} : vector<4x4xf32>, vector<4x256xf32>, vector<4x256xf32> -> vector<4x256xf32>
    %72 = vector.extract_strided_slice %70 {offsets = [0, 0], sizes = [4, 128], strides = [1, 1]} : vector<4x256xf32> to vector<4x128xf32>
    %73 = vector.extract_strided_slice %70 {offsets = [0, 128], sizes = [4, 128], strides = [1, 1]} : vector<4x256xf32> to vector<4x128xf32>
    %74 = vector.extract_strided_slice %71 {offsets = [0, 0], sizes = [4, 128], strides = [1, 1]} : vector<4x256xf32> to vector<4x128xf32>
    %75 = vector.extract_strided_slice %71 {offsets = [0, 128], sizes = [4, 128], strides = [1, 1]} : vector<4x256xf32> to vector<4x128xf32>
    %c0_29 = arith.constant 0 : index
    %c768 = arith.constant 768 : index
    %76 = vector.load %arg2[%c0_29, %c768] : memref<128x896xf32, #tpu.memory_space<vmem>>, vector<128x128xf32>
    %77 = arith.mulf %69, %72 : vector<4x128xf32>
    %cst_30 = arith.constant dense<0.000000e+00> : vector<4x128xf32>
    %78 = tpu.matmul %77, %76, %cst_30 {dimension_numbers = #tpu.dot_dimension_numbers<[1], [0], [0], [1], [0, 0, 1, 1], [], []>} : vector<4x128xf32>, vector<128x128xf32>, vector<4x128xf32> -> vector<4x128xf32>
    %79 = arith.mulf %69, %74 : vector<4x128xf32>
    %cst_31 = arith.constant dense<0.000000e+00> : vector<4x128xf32>
    %80 = tpu.matmul %79, %76, %cst_31 {dimension_numbers = #tpu.dot_dimension_numbers<[1], [0], [0], [1], [0, 0, 1, 1], [], []>} : vector<4x128xf32>, vector<128x128xf32>, vector<4x128xf32> -> vector<4x128xf32>
    %81 = arith.maximumf %78, %80 : vector<4x128xf32>
    %82 = arith.subf %78, %81 : vector<4x128xf32>
    %83 = math.exp %82 : vector<4x128xf32>
    %84 = arith.subf %80, %81 : vector<4x128xf32>
    %85 = math.exp %84 : vector<4x128xf32>
    %86 = arith.addf %83, %85 : vector<4x128xf32>
    %87 = tpu.reciprocal %86 {approx = true} : vector<4x128xf32> -> vector<4x128xf32>
    %88 = arith.mulf %83, %87 : vector<4x128xf32>
    %89 = arith.mulf %88, %73 : vector<4x128xf32>
    %90 = arith.mulf %85, %87 : vector<4x128xf32>
    %91 = arith.mulf %90, %75 : vector<4x128xf32>
    %92 = arith.addf %89, %91 : vector<4x128xf32>
    %c0_32 = arith.constant 0 : index
    %c384_33 = arith.constant 384 : index
    %93 = vector.load %arg2[%c0_32, %c384_33] : memref<128x896xf32, #tpu.memory_space<vmem>>, vector<128x128xf32>
    %cst_34 = arith.constant dense<0.000000e+00> : vector<4x128xf32>
    %94 = tpu.matmul %92, %93, %cst_34 {dimension_numbers = #tpu.dot_dimension_numbers<[1], [0], [0], [1], [0, 0, 1, 1], [], []>} : vector<4x128xf32>, vector<128x128xf32>, vector<4x128xf32> -> vector<4x128xf32>
    %c0_35 = arith.constant 0 : index
    %c1024 = arith.constant 1024 : index
    %95 = vector.load %arg3[%c0_35, %c1024] : memref<4x1536xf32, #tpu.memory_space<vmem>>, vector<4x128xf32>
    %96 = arith.addf %94, %95 : vector<4x128xf32>
    %cst_36 = arith.constant dense<0.000000e+00> : vector<4x128xf32>
    %97 = tpu.matmul %64, %96, %cst_36 {dimension_numbers = #tpu.dot_dimension_numbers<[1], [0], [0], [1], [0, 0, 1, 1], [], []>} : vector<4x4xf32>, vector<4x128xf32>, vector<4x128xf32> -> vector<4x128xf32>
    %98 = tpu.concatenate %96, %97 in 1 : vector<4x128xf32>, vector<4x128xf32> -> vector<4x256xf32>
    %c0_37 = arith.constant 0 : index
    %c384_38 = arith.constant 384 : index
    %99 = vector.load %arg1[%c0_37, %c384_38] : memref<256x512xf32, #tpu.memory_space<vmem>>, vector<256x128xf32>
    %cst_39 = arith.constant dense<0.000000e+00> : vector<4x128xf32>
    %100 = tpu.matmul %98, %99, %cst_39 {dimension_numbers = #tpu.dot_dimension_numbers<[1], [0], [0], [1], [0, 0, 1, 1], [], []>} : vector<4x256xf32>, vector<256x128xf32>, vector<4x128xf32> -> vector<4x128xf32>
    %c0_40 = arith.constant 0 : index
    %c1152 = arith.constant 1152 : index
    %101 = vector.load %arg3[%c0_40, %c1152] : memref<4x1536xf32, #tpu.memory_space<vmem>>, vector<4x128xf32>
    %102 = arith.addf %100, %101 : vector<4x128xf32>
    %cst_41 = arith.constant 0.000000e+00 : f32
    %103 = vector.broadcast %cst_41 : f32 to vector<4x128xf32>
    %104 = arith.maximumf %102, %103 : vector<4x128xf32>
    %c0_42 = arith.constant 0 : index
    %c512_43 = arith.constant 512 : index
    %105 = vector.load %arg2[%c0_42, %c512_43] : memref<128x896xf32, #tpu.memory_space<vmem>>, vector<128x128xf32>
    %cst_44 = arith.constant dense<0.000000e+00> : vector<4x128xf32>
    %106 = tpu.matmul %104, %105, %cst_44 {dimension_numbers = #tpu.dot_dimension_numbers<[1], [0], [0], [1], [0, 0, 1, 1], [], []>} : vector<4x128xf32>, vector<128x128xf32>, vector<4x128xf32> -> vector<4x128xf32>
    %c0_45 = arith.constant 0 : index
    %c1280 = arith.constant 1280 : index
    %107 = vector.load %arg3[%c0_45, %c1280] : memref<4x1536xf32, #tpu.memory_space<vmem>>, vector<4x128xf32>
    %108 = arith.addf %106, %107 : vector<4x128xf32>
    %c0_46 = arith.constant 0 : index
    %c640_47 = arith.constant 640 : index
    %109 = vector.load %arg2[%c0_46, %c640_47] : memref<128x896xf32, #tpu.memory_space<vmem>>, vector<128x128xf32>
    %cst_48 = arith.constant dense<0.000000e+00> : vector<4x128xf32>
    %110 = tpu.matmul %108, %109, %cst_48 {dimension_numbers = #tpu.dot_dimension_numbers<[1], [0], [0], [1], [0, 0, 1, 1], [], []>} : vector<4x128xf32>, vector<128x128xf32>, vector<4x128xf32> -> vector<4x128xf32>
    %c0_49 = arith.constant 0 : index
    %c1408 = arith.constant 1408 : index
    %111 = vector.load %arg3[%c0_49, %c1408] : memref<4x1536xf32, #tpu.memory_space<vmem>>, vector<4x128xf32>
    %112 = arith.addf %110, %111 : vector<4x128xf32>
    %113 = tpu.iota {dimensions = array<i32: 1>} : vector<1x128xi32>
    %c5_i32 = arith.constant 5 : i32
    %114 = vector.broadcast %c5_i32 : i32 to vector<1x128xi32>
    %115 = arith.cmpi eq, %113, %114 : vector<1x128xi32>
    %cst_50 = arith.constant 0.000000e+00 : f32
    %116 = vector.shape_cast %115 : vector<1x128xi1> to vector<1x128xi1>
    %117 = vector.broadcast %116 : vector<1x128xi1> to vector<4x128xi1>
    %118 = vector.shape_cast %50 : vector<4x1xf32> to vector<4x1xf32>
    %119 = vector.broadcast %118 : vector<4x1xf32> to vector<4x128xf32>
    %120 = vector.broadcast %cst_50 : f32 to vector<4x128xf32>
    %121 = arith.select %117, %119, %120 : vector<4x128xi1>, vector<4x128xf32>
    %122 = arith.addf %112, %121 : vector<4x128xf32>
    %c0_51 = arith.constant 0 : index
    %c0_52 = arith.constant 0 : index
    %123 = vector.load %arg4[%c0_51, %c0_52] : memref<4x128xf32, #tpu.memory_space<vmem>>, vector<4x128xf32>
    tpu.vector_store %arg4[%c0_51, %c0_52], %122 {strides = array<i32>} : memref<4x128xf32, #tpu.memory_space<vmem>>, vector<4x128xf32>,
    return
  }
}

</mosaic_0001>

<llo_original>
// kernel: squeeze.1
$region0: #{squeeze.1}
  %s0 = inlined_call_operand.vmem [shape: f32[4], index: 0, kind: input, shape index: {}]
  %s1 = inlined_call_operand.vmem [shape: f32[2,2], index: 1, kind: output, shape index: {}]
  $region1: #{squeeze.1} parent=0
    #allocation0 [shape = 'u8[4096]{0}', space=vmem, size = 0x1000, scoped, tag = 'scoped mem for output reshape']
    #allocation1 [shape = 'u8[4096]{0}', space=vmem, size = 0x1000, scoped, tag = 'scoped mem for input reshape']
    %s3 = sshllo.u32 0, 1
    %v4 = vld [vmem:[%s0] sm:%s3]
    %5 = vst [vmem:[#allocation1] sm:%s3] %v4
    %v6 = vld [vmem:[#allocation1] sm:$0x1]
    %vm7 = vcmask 15360
    %8 = vst.msk [vmem:[#allocation0] sm:$0x1] %vm7, %v6
    %v9 = vld [vmem:[#allocation1] sm:$0x1]
    %10 = vrot.lane.b32.xlu0 %v9, 126
    %v11 = vpop.permute.xlu0 %10
    %vm12 = vcmask 15360
    %s13 = scalar_lea.vmem [#allocation0], 1
    %14 = vst.msk [vmem:[%s13] sm:$0x1] %vm12, %v11
    %s16 = sshllo.u32 0, 2
    %v18 = vld [vmem:[#allocation0] sm:%s16]
    %s19 = sshllo.u32 0, 2
    %20 = vst [vmem:[%s1] sm:%s19] %v18

// kernel: model_forward.1
$region0: #{model_forward.1}
  #allocation0 [shape = 'u32[]', space=smem, size = 0x4, offset = 0x4, fixed_abs, tag = 'smem constant byte address 0x4 - core index']
  #allocation1 [shape = 'u32[144,128]{1,0:T(1,128)}', space=vmem, size = 0x12000, scoped, tag = 'internal scratch']
  %s0 = inlined_call_operand.vmem [shape: f32[256,64], index: 0, kind: input, shape index: {}]
  %s1 = inlined_call_operand.vmem [shape: f32[256,512], index: 1, kind: input, shape index: {}]
  %s2 = inlined_call_operand.vmem [shape: f32[128,896], index: 2, kind: input, shape index: {}]
  %s3 = inlined_call_operand.vmem [shape: f32[4,1536], index: 3, kind: input, shape index: {}]
  %s4 = inlined_call_operand.vmem [shape: f32[4,128], index: 4, kind: output, shape index: {}]
  %s5 = sld [smem:[#allocation0]]
  $region26: #{model_forward.1} parent=0
    _
  %s7 = ssub.s32 1, %s5
  %s8 = scalar_select 0, %s7, %s5
  // Predicated region
  $region2: #{model_forward.1} parent=0 // pred_check
    _
  $region3: #{model_forward.1} parent=0 // pred_check_branch
    %10 = sbr.rel (0) target = $region5
  $region4: #{model_forward.1} parent=0 // pred_region
    _
  $region5: #{model_forward.1} parent=0 // pred_fallthru
    _
  // Predicated region
  $region6: #{model_forward.1} parent=0 // pred_check
    _
  $region7: #{model_forward.1} parent=0 // pred_check_branch
    %12 = sbr.rel (0) target = $region9
  $region8: #{model_forward.1} parent=0 // pred_region
    _
  $region9: #{model_forward.1} parent=0 // pred_fallthru
    _
  // Predicated region
  $region10: #{model_forward.1} parent=0 // pred_check
    _
  $region11: #{model_forward.1} parent=0 // pred_check_branch
    %14 = sbr.rel (0) target = $region13
  $region12: #{model_forward.1} parent=0 // pred_region
    _
  $region13: #{model_forward.1} parent=0 // pred_fallthru
    _
  // Predicated region
  $region14: #{model_forward.1} parent=0 // pred_check
    _
  $region15: #{model_forward.1} parent=0 // pred_check_branch
    %16 = sbr.rel (0) target = $region17
  $region16: #{model_forward.1} parent=0 // pred_region
    _
  $region17: #{model_forward.1} parent=0 // pred_fallthru
    _
  %v17 = vld [vmem:[%s1] sm:$0xff]
  %v18 = vld [vmem:[%s1 + $0x20] sm:$0xff]
  %v19 = vld [vmem:[%s1 + $0x40] sm:$0xff]
  %v20 = vld [vmem:[%s1 + $0x60] sm:$0xff]
  %v21 = vld [vmem:[%s1 + $0x80] sm:$0xff]
  %v22 = vld [vmem:[%s1 + $0xa0] sm:$0xff]
  %v23 = vld [vmem:[%s1 + $0xc0] sm:$0xff]
  %v24 = vld [vmem:[%s1 + $0xe0] sm:$0xff]
  %v25 = vld [vmem:[%s0] sm:$0xff]
  %v26 = vld [vmem:[%s0 + $0x8] sm:$0xff]
  %v27 = vld [vmem:[%s0 + $0x10] sm:$0xff]
  %v28 = vld [vmem:[%s0 + $0x18] sm:$0xff]
  %v29 = vld [vmem:[%s0 + $0x20] sm:$0xff]
  %v30 = vld [vmem:[%s0 + $0x28] sm:$0xff]
  %v31 = vld [vmem:[%s0 + $0x30] sm:$0xff]
  %v32 = vld [vmem:[%s0 + $0x38] sm:$0xff]
  %v33 = vld [vmem:[%s0 + $0x40] sm:$0xff]
  %v34 = vld [vmem:[%s0 + $0x48] sm:$0xff]
  %v35 = vld [vmem:[%s0 + $0x50] sm:$0xff]
  %v36 = vld [vmem:[%s0 + $0x58] sm:$0xff]
  %v37 = vld [vmem:[%s0 + $0x60] sm:$0xff]
  %v38 = vld [vmem:[%s0 + $0x68] sm:$0xff]
  %v39 = vld [vmem:[%s0 + $0x70] sm:$0xff]
  %v40 = vld [vmem:[%s0 + $0x78] sm:$0xff]
  %v41 = vld [vmem:[%s0 + $0x80] sm:$0xff]
  %v42 = vld [vmem:[%s0 + $0x88] sm:$0xff]
  %v43 = vld [vmem:[%s0 + $0x90] sm:$0xff]
  %v44 = vld [vmem:[%s0 + $0x98] sm:$0xff]
  %v45 = vld [vmem:[%s0 + $0xa0] sm:$0xff]
  %v46 = vld [vmem:[%s0 + $0xa8] sm:$0xff]
  %v47 = vld [vmem:[%s0 + $0xb0] sm:$0xff]
  %v48 = vld [vmem:[%s0 + $0xb8] sm:$0xff]
  %v49 = vld [vmem:[%s0 + $0xc0] sm:$0xff]
  %v50 = vld [vmem:[%s0 + $0xc8] sm:$0xff]
  %v51 = vld [vmem:[%s0 + $0xd0] sm:$0xff]
  %v52 = vld [vmem:[%s0 + $0xd8] sm:$0xff]
  %v53 = vld [vmem:[%s0 + $0xe0] sm:$0xff]
  %v54 = vld [vmem:[%s0 + $0xe8] sm:$0xff]
  %v55 = vld [vmem:[%s0 + $0xf0] sm:$0xff]
  %v56 = vld [vmem:[%s0 + $0xf8] sm:$0xff]
  %vm57 = vcmask 523264
  %v59 = vsel %vm57, %v25, 0
  %v62 = vsel %vm57, %v26, 0
  %v65 = vsel %vm57, %v27, 0
  %v68 = vsel %vm57, %v28, 0
  %v71 = vsel %vm57, %v29, 0
  %v74 = vsel %vm57, %v30, 0
  %v77 = vsel %vm57, %v31, 0
  %v80 = vsel %vm57, %v32, 0
  %v83 = vsel %vm57, %v33, 0
  %v86 = vsel %vm57, %v34, 0
  %v89 = vsel %vm57, %v35, 0
  %v92 = vsel %vm57, %v36, 0
  %v95 = vsel %vm57, %v37, 0
  %v98 = vsel %vm57, %v38, 0
  %v101 = vsel %vm57, %v39, 0
  %v104 = vsel %vm57, %v40, 0
  %v107 = vsel %vm57, %v41, 0
  %v110 = vsel %vm57, %v42, 0
  %v113 = vsel %vm57, %v43, 0
  %v116 = vsel %vm57, %v44, 0
  %v119 = vsel %vm57, %v45, 0
  %v122 = vsel %vm57, %v46, 0
  %v125 = vsel %vm57, %v47, 0
  %v128 = vsel %vm57, %v48, 0
  %v131 = vsel %vm57, %v49, 0
  %v134 = vsel %vm57, %v50, 0
  %v137 = vsel %vm57, %v51, 0
  %v140 = vsel %vm57, %v52, 0
  %v143 = vsel %vm57, %v53, 0
  %v146 = vsel %vm57, %v54, 0
  %v149 = vsel %vm57, %v55, 0
  %v152 = vsel %vm57, %v56, 0
  %154 = vmatprep.subr.mxu0 0.0
  %155 = vmatpush1.msra.mxu0 %v17
  %156 = vmatprep.subr.mxu0 0.0
  %157 = vmatpush1.msra.mxu0 %v18
  %158 = vmatprep.subr.mxu0 0.0
  %159 = vmatpush1.msra.mxu0 %v19
  %160 = vmatprep.subr.mxu0 0.0
  %161 = vmatpush1.msra.mxu0 %v20
  %162 = vmatprep.subr.mxu0 0.0
  %163 = vmatpush1.msra.mxu0 %v21
  %164 = vmatprep.subr.mxu0 0.0
  %165 = vmatpush1.msra.mxu0 %v22
  %166 = vmatprep.subr.mxu0 0.0
  %167 = vmatpush1.msra.mxu0 %v23
  %168 = vmatprep.subr.mxu0 0.0
  %169 = vmatpush1.msra.mxu0 %v24
  %170 = vmatprep.subr.mxu0 0.0
  %171 = vmatpush1.msra.mxu0 0.0
  %172 = vmatprep.subr.mxu0 0.0
  %173 = vmatpush1.msra.mxu0 0.0
  %174 = vmatprep.subr.mxu0 0.0
  %175 = vmatpush1.msra.mxu0 0.0
  %176 = vmatprep.subr.mxu0 0.0
  %177 = vmatpush1.msra.mxu0 0.0
  %178 = vmatprep.subr.mxu0 0.0
  %179 = vmatpush1.msra.mxu0 0.0
  %180 = vmatprep.subr.mxu0 0.0
  %181 = vmatpush1.msra.mxu0 0.0
  %182 = vmatprep.subr.mxu0 0.0
  %183 = vmatpush1.msra.mxu0 0.0
  %184 = vmatprep.subr.mxu0 0.0
  %185 = vmatpush1.msra.mxu0 0.0
  %186 = vmatprep.subr.mxu0 0.0
  %187 = vmatpush1.msra.mxu0 0.0
  %188 = vmatprep.subr.mxu0 0.0
  %189 = vmatpush1.msra.mxu0 0.0
  %190 = vmatprep.subr.mxu0 0.0
  %191 = vmatpush1.msra.mxu0 0.0
  %192 = vmatprep.subr.mxu0 0.0
  %193 = vmatpush1.msra.mxu0 0.0
  %194 = vmatprep.subr.mxu0 0.0
  %195 = vmatpush1.msra.mxu0 0.0
  %196 = vmatprep.subr.mxu0 0.0
  %197 = vmatpush1.msra.mxu0 0.0
  %198 = vmatprep.subr.mxu0 0.0
  %199 = vmatpush1.msra.mxu0 0.0
  %200 = vmatprep.subr.mxu0 0.0
  %201 = vmatpush1.msra.mxu0 0.0
  %202 = vmatprep.subr.mxu0 0.0
  %203 = vmatpush1.msra.mxu0 0.0
  %204 = vmatprep.subr.mxu0 0.0
  %205 = vmatpush1.msra.mxu0 0.0
  %206 = vmatprep.subr.mxu0 0.0
  %207 = vmatpush1.msra.mxu0 0.0
  %208 = vmatprep.subr.mxu0 0.0
  %209 = vmatpush1.msra.mxu0 0.0
  %210 = vmatprep.subr.mxu0 0.0
  %211 = vmatpush1.msra.mxu0 0.0
  %212 = vmatprep.subr.mxu0 0.0
  %213 = vmatpush1.msra.mxu0 0.0
  %214 = vmatprep.subr.mxu0 0.0
  %215 = vmatpush1.msra.mxu0 0.0
  %216 = vmatprep.subr.mxu0 0.0
  %217 = vmatpush1.msra.mxu0 0.0
  %218 = vmatprep.mubr.f32.mxu0 0.0
  %219 = vmatmul.mubr.f32.gmra.mrb[0].mxu0 %v59
  %v220 = vpop.f32.mrb[0].mxu0
  %v221 = vadd.f32 0.0, %v220
  %v222 = vpop.f32.mrb[0].mxu0
  %223 = vmatprep.mubr.f32.mxu0 0.0
  %224 = vmatmul.mubr.f32.gmra.mrb[0].mxu0 %v62
  %v225 = vpop.f32.mrb[0].mxu0
  %v226 = vadd.f32 0.0, %v225
  %v227 = vpop.f32.mrb[0].mxu0
  %228 = vmatprep.mubr.f32.mxu0 0.0
  %229 = vmatmul.mubr.f32.gmra.mrb[0].mxu0 %v65
  %v230 = vpop.f32.mrb[0].mxu0
  %v231 = vadd.f32 0.0, %v230
  %v232 = vpop.f32.mrb[0].mxu0
  %233 = vmatprep.mubr.f32.mxu0 0.0
  %234 = vmatmul.mubr.f32.gmra.mrb[0].mxu0 %v68
  %v235 = vpop.f32.mrb[0].mxu0
  %v236 = vadd.f32 0.0, %v235
  %v237 = vpop.f32.mrb[0].mxu0
  %238 = vmatprep.mubr.f32.mxu0 0.0
  %239 = vmatmul.mubr.f32.gmra.mrb[0].mxu0 %v71
  %v240 = vpop.f32.mrb[0].mxu0
  %v241 = vadd.f32 0.0, %v240
  %v242 = vpop.f32.mrb[0].mxu0
  %243 = vmatprep.mubr.f32.mxu0 0.0
  %244 = vmatmul.mubr.f32.gmra.mrb[0].mxu0 %v74
  %v245 = vpop.f32.mrb[0].mxu0
  %v246 = vadd.f32 0.0, %v245
  %v247 = vpop.f32.mrb[0].mxu0
  %248 = vmatprep.mubr.f32.mxu0 0.0
  %249 = vmatmul.mubr.f32.gmra.mrb[0].mxu0 %v77
  %v250 = vpop.f32.mrb[0].mxu0
  %v251 = vadd.f32 0.0, %v250
  %v252 = vpop.f32.mrb[0].mxu0
  %253 = vmatprep.mubr.f32.mxu0 0.0
  %254 = vmatmul.mubr.f32.gmra.mrb[0].mxu0 %v80
  %v255 = vpop.f32.mrb[0].mxu0
  %v256 = vadd.f32 0.0, %v255
  %v257 = vpop.f32.mrb[0].mxu0
  %258 = vmatprep.mubr.f32.mxu0 0.0
  %259 = vmatmul.mubr.f32.gmra.mrb[0].mxu0 %v83
  %v260 = vpop.f32.mrb[0].mxu0
  %v261 = vadd.f32 0.0, %v260
  %v262 = vpop.f32.mrb[0].mxu0
  %263 = vmatprep.mubr.f32.mxu0 0.0
  %264 = vmatmul.mubr.f32.gmra.mrb[0].mxu0 %v86
  %v265 = vpop.f32.mrb[0].mxu0
  %v266 = vadd.f32 0.0, %v265
  %v267 = vpop.f32.mrb[0].mxu0
  %268 = vmatprep.mubr.f32.mxu0 0.0
  %269 = vmatmul.mubr.f32.gmra.mrb[0].mxu0 %v89
  %v270 = vpop.f32.mrb[0].mxu0
  %v271 = vadd.f32 0.0, %v270
  %v272 = vpop.f32.mrb[0].mxu0
  %273 = vmatprep.mubr.f32.mxu0 0.0
  %274 = vmatmul.mubr.f32.gmra.mrb[0].mxu0 %v92
  %v275 = vpop.f32.mrb[0].mxu0
  %v276 = vadd.f32 0.0, %v275
  %v277 = vpop.f32.mrb[0].mxu0
  %278 = vmatprep.mubr.f32.mxu0 0.0
  %279 = vmatmul.mubr.f32.gmra.mrb[0].mxu0 %v95
  %v280 = vpop.f32.mrb[0].mxu0
  %v281 = vadd.f32 0.0, %v280
  %v282 = vpop.f32.mrb[0].mxu0
  %283 = vmatprep.mubr.f32.mxu0 0.0
  %284 = vmatmul.mubr.f32.gmra.mrb[0].mxu0 %v98
  %v285 = vpop.f32.mrb[0].mxu0
  %v286 = vadd.f32 0.0, %v285
  %v287 = vpop.f32.mrb[0].mxu0
  %288 = vmatprep.mubr.f32.mxu0 0.0
  %289 = vmatmul.mubr.f32.gmra.mrb[0].mxu0 %v101
  %v290 = vpop.f32.mrb[0].mxu0
  %v291 = vadd.f32 0.0, %v290
  %v292 = vpop.f32.mrb[0].mxu0
  %293 = vmatprep.mubr.f32.mxu0 0.0
  %294 = vmatmul.mubr.f32.gmra.mrb[0].mxu0 %v104
  %v295 = vpop.f32.mrb[0].mxu0
  %v296 = vadd.f32 0.0, %v295
  %v297 = vpop.f32.mrb[0].mxu0
  %298 = vmatprep.mubr.f32.mxu0 0.0
  %299 = vmatmul.mubr.f32.gmra.mrb[0].mxu0 %v107
  %v300 = vpop.f32.mrb[0].mxu0
  %v301 = vadd.f32 0.0, %v300
  %v302 = vpop.f32.mrb[0].mxu0
  %303 = vmatprep.mubr.f32.mxu0 0.0
  %304 = vmatmul.mubr.f32.gmra.mrb[0].mxu0 %v110
  %v305 = vpop.f32.mrb[0].mxu0
  %v306 = vadd.f32 0.0, %v305
  %v307 = vpop.f32.mrb[0].mxu0
  %308 = vmatprep.mubr.f32.mxu0 0.0
  %309 = vmatmul.mubr.f32.gmra.mrb[0].mxu0 %v113
  %v310 = vpop.f32.mrb[0].mxu0
  %v311 = vadd.f32 0.0, %v310
  %v312 = vpop.f32.mrb[0].mxu0
  %313 = vmatprep.mubr.f32.mxu0 0.0
  %314 = vmatmul.mubr.f32.gmra.mrb[0].mxu0 %v116
  %v315 = vpop.f32.mrb[0].mxu0
  %v316 = vadd.f32 0.0, %v315
  %v317 = vpop.f32.mrb[0].mxu0
  %318 = vmatprep.mubr.f32.mxu0 0.0
  %319 = vmatmul.mubr.f32.gmra.mrb[0].mxu0 %v119
  %v320 = vpop.f32.mrb[0].mxu0
  %v321 = vadd.f32 0.0, %v320
  %v322 = vpop.f32.mrb[0].mxu0
  %323 = vmatprep.mubr.f32.mxu0 0.0
  %324 = vmatmul.mubr.f32.gmra.mrb[0].mxu0 %v122
  %v325 = vpop.f32.mrb[0].mxu0
  %v326 = vadd.f32 0.0, %v325
  %v327 = vpop.f32.mrb[0].mxu0
  %328 = vmatprep.mubr.f32.mxu0 0.0
  %329 = vmatmul.mubr.f32.gmra.mrb[0].mxu0 %v125
  %v330 = vpop.f32.mrb[0].mxu0
  %v331 = vadd.f32 0.0, %v330
  %v332 = vpop.f32.mrb[0].mxu0
  %333 = vmatprep.mubr.f32.mxu0 0.0
  %334 = vmatmul.mubr.f32.gmra.mrb[0].mxu0 %v128
  %v335 = vpop.f32.mrb[0].mxu0
  %v336 = vadd.f32 0.0, %v335
  %v337 = vpop.f32.mrb[0].mxu0
  %338 = vmatprep.mubr.f32.mxu0 0.0
  %339 = vmatmul.mubr.f32.gmra.mrb[0].mxu0 %v131
  %v340 = vpop.f32.mrb[0].mxu0
  %v341 = vadd.f32 0.0, %v340
  %v342 = vpop.f32.mrb[0].mxu0
  %343 = vmatprep.mubr.f32.mxu0 0.0
  %344 = vmatmul.mubr.f32.gmra.mrb[0].mxu0 %v134
  %v345 = vpop.f32.mrb[0].mxu0
  %v346 = vadd.f32 0.0, %v345
  %v347 = vpop.f32.mrb[0].mxu0
  %348 = vmatprep.mubr.f32.mxu0 0.0
  %349 = vmatmul.mubr.f32.gmra.mrb[0].mxu0 %v137
  %v350 = vpop.f32.mrb[0].mxu0
  %v351 = vadd.f32 0.0, %v350
  %v352 = vpop.f32.mrb[0].mxu0
  %353 = vmatprep.mubr.f32.mxu0 0.0
  %354 = vmatmul.mubr.f32.gmra.mrb[0].mxu0 %v140
  %v355 = vpop.f32.mrb[0].mxu0
  %v356 = vadd.f32 0.0, %v355
  %v357 = vpop.f32.mrb[0].mxu0
  %358 = vmatprep.mubr.f32.mxu0 0.0
  %359 = vmatmul.mubr.f32.gmra.mrb[0].mxu0 %v143
  %v360 = vpop.f32.mrb[0].mxu0
  %v361 = vadd.f32 0.0, %v360
  %v362 = vpop.f32.mrb[0].mxu0
  %363 = vmatprep.mubr.f32.mxu0 0.0
  %364 = vmatmul.mubr.f32.gmra.mrb[0].mxu0 %v146
  %v365 = vpop.f32.mrb[0].mxu0
  %v366 = vadd.f32 0.0, %v365
  %v367 = vpop.f32.mrb[0].mxu0
  %368 = vmatprep.mubr.f32.mxu0 0.0
  %369 = vmatmul.mubr.f32.gmra.mrb[0].mxu0 %v149
  %v370 = vpop.f32.mrb[0].mxu0
  %v371 = vadd.f32 0.0, %v370
  %v372 = vpop.f32.mrb[0].mxu0
  %373 = vmatprep.mubr.f32.mxu0 0.0
  %374 = vmatmul.mubr.f32.gmra.mrb[0].mxu0 %v152
  %v375 = vpop.f32.mrb[0].mxu0
  %v376 = vadd.f32 0.0, %v375
  %v377 = vpop.f32.mrb[0].mxu0
  %378 = vdwg.mxu0
  %v379 = vmax.f32 %v221, 0.0
  %v380 = vmax.f32 %v226, 0.0
  %v381 = vmax.f32 %v231, 0.0
  %v382 = vmax.f32 %v236, 0.0
  %v383 = vmax.f32 %v241, 0.0
  %v384 = vmax.f32 %v246, 0.0
  %v385 = vmax.f32 %v251, 0.0
  %v386 = vmax.f32 %v256, 0.0
  %v387 = vmax.f32 %v261, 0.0
  %v388 = vmax.f32 %v266, 0.0
  %v389 = vmax.f32 %v271, 0.0
  %v390 = vmax.f32 %v276, 0.0
  %v391 = vmax.f32 %v281, 0.0
  %v392 = vmax.f32 %v286, 0.0
  %v393 = vmax.f32 %v291, 0.0
  %v394 = vmax.f32 %v296, 0.0
  %v395 = vmax.f32 %v301, 0.0
  %v396 = vmax.f32 %v306, 0.0
  %v397 = vmax.f32 %v311, 0.0
  %v398 = vmax.f32 %v316, 0.0
  %v399 = vmax.f32 %v321, 0.0
  %v400 = vmax.f32 %v326, 0.0
  %v401 = vmax.f32 %v331, 0.0
  %v402 = vmax.f32 %v336, 0.0
  %v403 = vmax.f32 %v341, 0.0
  %v404 = vmax.f32 %v346, 0.0
  %v405 = vmax.f32 %v351, 0.0
  %v406 = vmax.f32 %v356, 0.0
  %v407 = vmax.f32 %v361, 0.0
  %v408 = vmax.f32 %v366, 0.0
  %v409 = vmax.f32 %v371, 0.0
  %v410 = vmax.f32 %v376, 0.0
  %v411 = vld [vmem:[%s3] sm:$0xff]
  %v413 = vcombine.high %v411, %v411
  %415 = vmatprep.subr.mxu0 0.0
  %416 = vmatpush1.msra.mxu0 %v379
  %417 = vmatprep.subr.mxu0 0.0
  %418 = vmatpush1.msra.mxu0 %v380
  %419 = vmatprep.subr.mxu0 0.0
  %420 = vmatpush1.msra.mxu0 %v381
  %421 = vmatprep.subr.mxu0 0.0
  %422 = vmatpush1.msra.mxu0 %v382
  %423 = vmatprep.subr.mxu0 0.0
  %424 = vmatpush1.msra.mxu0 %v383
  %425 = vmatprep.subr.mxu0 0.0
  %426 = vmatpush1.msra.mxu0 %v384
  %427 = vmatprep.subr.mxu0 0.0
  %428 = vmatpush1.msra.mxu0 %v385
  %429 = vmatprep.subr.mxu0 0.0
  %430 = vmatpush1.msra.mxu0 %v386
  %431 = vmatprep.subr.mxu0 0.0
  %432 = vmatpush1.msra.mxu0 %v387
  %433 = vmatprep.subr.mxu0 0.0
  %434 = vmatpush1.msra.mxu0 %v388
  %435 = vmatprep.subr.mxu0 0.0
  %436 = vmatpush1.msra.mxu0 %v389
  %437 = vmatprep.subr.mxu0 0.0
  %438 = vmatpush1.msra.mxu0 %v390
  %439 = vmatprep.subr.mxu0 0.0
  %440 = vmatpush1.msra.mxu0 %v391
  %441 = vmatprep.subr.mxu0 0.0
  %442 = vmatpush1.msra.mxu0 %v392
  %443 = vmatprep.subr.mxu0 0.0
  %444 = vmatpush1.msra.mxu0 %v393
  %445 = vmatprep.subr.mxu0 0.0
  %446 = vmatpush1.msra.mxu0 %v394
  %447 = vmatprep.subr.mxu0 0.0
  %448 = vmatpush1.msra.mxu0 %v395
  %449 = vmatprep.subr.mxu0 0.0
  %450 = vmatpush1.msra.mxu0 %v396
  %451 = vmatprep.subr.mxu0 0.0
  %452 = vmatpush1.msra.mxu0 %v397
  %453 = vmatprep.subr.mxu0 0.0
  %454 = vmatpush1.msra.mxu0 %v398
  %455 = vmatprep.subr.mxu0 0.0
  %456 = vmatpush1.msra.mxu0 %v399
  %457 = vmatprep.subr.mxu0 0.0
  %458 = vmatpush1.msra.mxu0 %v400
  %459 = vmatprep.subr.mxu0 0.0
  %460 = vmatpush1.msra.mxu0 %v401
  %461 = vmatprep.subr.mxu0 0.0
  %462 = vmatpush1.msra.mxu0 %v402
  %463 = vmatprep.subr.mxu0 0.0
  %464 = vmatpush1.msra.mxu0 %v403
  %465 = vmatprep.subr.mxu0 0.0
  %466 = vmatpush1.msra.mxu0 %v404
  %467 = vmatprep.subr.mxu0 0.0
  %468 = vmatpush1.msra.mxu0 %v405
  %469 = vmatprep.subr.mxu0 0.0
  %470 = vmatpush1.msra.mxu0 %v406
  %471 = vmatprep.subr.mxu0 0.0
  %472 = vmatpush1.msra.mxu0 %v407
  %473 = vmatprep.subr.mxu0 0.0
  %474 = vmatpush1.msra.mxu0 %v408
  %475 = vmatprep.subr.mxu0 0.0
  %476 = vmatpush1.msra.mxu0 %v409
  %477 = vmatprep.subr.mxu0 0.0
  %478 = vmatpush1.msra.mxu0 %v410
  %479 = vmatprep.mubr.f32.mxu0 %v413
  %480 = vmatmul.mubr.f32.gmra.mrb[0].mxu0 %v411
  %v481 = vpop.f32.mrb[0].mxu0
  %v482 = vadd.f32 0.0, %v481
  %v483 = vpop.f32.mrb[0].mxu0
  %484 = vdwg.mxu0
  %v485 = vlaneseq
  %v486 = vshrl.u32 %v485, 7
  %vm487 = vcmp.lt.s32.totalorder %v486, 2
  %v488 = vsel %vm487, 1, 0
  %v489 = vcvt.s32.f32 %v488
  %v490 = vsub.f32 1.0, %v489
  %v491 = vmul.f32 %v482, %v489
  %v492 = vmul.f32 %v482, %v490
  %v493 = vld [vmem:[%s1 + $0x8] sm:$0xff]
  %v494 = vld [vmem:[%s1 + $0x28] sm:$0xff]
  %v495 = vld [vmem:[%s1 + $0x48] sm:$0xff]
  %v496 = vld [vmem:[%s1 + $0x68] sm:$0xff]
  %v497 = vld [vmem:[%s1 + $0x88] sm:$0xff]
  %v498 = vld [vmem:[%s1 + $0xa8] sm:$0xff]
  %v499 = vld [vmem:[%s1 + $0xc8] sm:$0xff]
  %v500 = vld [vmem:[%s1 + $0xe8] sm:$0xff]
  %v501 = vld [vmem:[%s1 + $0x108] sm:$0xff]
  %v502 = vld [vmem:[%s1 + $0x128] sm:$0xff]
  %v503 = vld [vmem:[%s1 + $0x148] sm:$0xff]
  %v504 = vld [vmem:[%s1 + $0x168] sm:$0xff]
  %v505 = vld [vmem:[%s1 + $0x188] sm:$0xff]
  %v506 = vld [vmem:[%s1 + $0x1a8] sm:$0xff]
  %v507 = vld [vmem:[%s1 + $0x1c8] sm:$0xff]
  %v508 = vld [vmem:[%s1 + $0x1e8] sm:$0xff]
  %v509 = vld [vmem:[%s1 + $0x208] sm:$0xff]
  %v510 = vld [vmem:[%s1 + $0x228] sm:$0xff]
  %v511 = vld [vmem:[%s1 + $0x248] sm:$0xff]
  %v512 = vld [vmem:[%s1 + $0x268] sm:$0xff]
  %v513 = vld [vmem:[%s1 + $0x288] sm:$0xff]
  %v514 = vld [vmem:[%s1 + $0x2a8] sm:$0xff]
  %v515 = vld [vmem:[%s1 + $0x2c8] sm:$0xff]
  %v516 = vld [vmem:[%s1 + $0x2e8] sm:$0xff]
  %v517 = vld [vmem:[%s1 + $0x308] sm:$0xff]
  %v518 = vld [vmem:[%s1 + $0x328] sm:$0xff]
  %v519 = vld [vmem:[%s1 + $0x348] sm:$0xff]
  %v520 = vld [vmem:[%s1 + $0x368] sm:$0xff]
  %v521 = vld [vmem:[%s1 + $0x388] sm:$0xff]
  %v522 = vld [vmem:[%s1 + $0x3a8] sm:$0xff]
  %v523 = vld [vmem:[%s1 + $0x3c8] sm:$0xff]
  %v524 = vld [vmem:[%s1 + $0x3e8] sm:$0xff]
  %v525 = vld [vmem:[%s3 + $0x8] sm:$0xf]
  %526 = vmatprep.subr.mxu0 0.0
  %527 = vmatpush1.msra.mxu0 %v493
  %528 = vmatprep.subr.mxu0 0.0
  %529 = vmatpush1.msra.mxu0 %v494
  %530 = vmatprep.subr.mxu0 0.0
  %531 = vmatpush1.msra.mxu0 %v495
  %532 = vmatprep.subr.mxu0 0.0
  %533 = vmatpush1.msra.mxu0 %v496
  %534 = vmatprep.subr.mxu0 0.0
  %535 = vmatpush1.msra.mxu0 %v497
  %536 = vmatprep.subr.mxu0 0.0
  %537 = vmatpush1.msra.mxu0 %v498
  %538 = vmatprep.subr.mxu0 0.0
  %539 = vmatpush1.msra.mxu0 %v499
  %540 = vmatprep.subr.mxu0 0.0
  %541 = vmatpush1.msra.mxu0 %v500
  %542 = vmatprep.subr.mxu0 0.0
  %543 = vmatpush1.msra.mxu0 %v501
  %544 = vmatprep.subr.mxu0 0.0
  %545 = vmatpush1.msra.mxu0 %v502
  %546 = vmatprep.subr.mxu0 0.0
  %547 = vmatpush1.msra.mxu0 %v503
  %548 = vmatprep.subr.mxu0 0.0
  %549 = vmatpush1.msra.mxu0 %v504
  %550 = vmatprep.subr.mxu0 0.0
  %551 = vmatpush1.msra.mxu0 %v505
  %552 = vmatprep.subr.mxu0 0.0
  %553 = vmatpush1.msra.mxu0 %v506
  %554 = vmatprep.subr.mxu0 0.0
  %555 = vmatpush1.msra.mxu0 %v507
  %556 = vmatprep.subr.mxu0 0.0
  %557 = vmatpush1.msra.mxu0 %v508
  %558 = vmatprep.subr.mxu0 0.0
  %559 = vmatpush1.msra.mxu0 %v509
  %560 = vmatprep.subr.mxu0 0.0
  %561 = vmatpush1.msra.mxu0 %v510
  %562 = vmatprep.subr.mxu0 0.0
  %563 = vmatpush1.msra.mxu0 %v511
  %564 = vmatprep.subr.mxu0 0.0
  %565 = vmatpush1.msra.mxu0 %v512
  %566 = vmatprep.subr.mxu0 0.0
  %567 = vmatpush1.msra.mxu0 %v513
  %568 = vmatprep.subr.mxu0 0.0
  %569 = vmatpush1.msra.mxu0 %v514
  %570 = vmatprep.subr.mxu0 0.0
  %571 = vmatpush1.msra.mxu0 %v515
  %572 = vmatprep.subr.mxu0 0.0
  %573 = vmatpush1.msra.mxu0 %v516
  %574 = vmatprep.subr.mxu0 0.0
  %575 = vmatpush1.msra.mxu0 %v517
  %576 = vmatprep.subr.mxu0 0.0
  %577 = vmatpush1.msra.mxu0 %v518
  %578 = vmatprep.subr.mxu0 0.0
  %579 = vmatpush1.msra.mxu0 %v519
  %580 = vmatprep.subr.mxu0 0.0
  %581 = vmatpush1.msra.mxu0 %v520
  %582 = vmatprep.subr.mxu0 0.0
  %583 = vmatpush1.msra.mxu0 %v521
  %584 = vmatprep.subr.mxu0 0.0
  %585 = vmatpush1.msra.mxu0 %v522
  %586 = vmatprep.subr.mxu0 0.0
  %587 = vmatpush1.msra.mxu0 %v523
  %588 = vmatprep.subr.mxu0 0.0
  %589 = vmatpush1.msra.mxu0 %v524
  %590 = vmatprep.mubr.f32.mxu0 %v492
  %591 = vmatmul.mubr.f32.gmra.mrb[0].mxu0 %v491
  %v592 = vpop.f32.mrb[0].mxu0
  %v593 = vadd.f32 %v525, %v592
  %v594 = vpop.f32.mrb[0].mxu0
  %595 = vdwg.mxu0
  %v596 = vmax.f32 %v593, 0.0
  %v597 = vmul.f32 %v596, %v489
  %v598 = vmul.f32 %v596, %v490
  %v599 = vld [vmem:[%s1 + $0x10] sm:$0xff]
  %v600 = vld [vmem:[%s1 + $0x30] sm:$0xff]
  %v601 = vld [vmem:[%s1 + $0x50] sm:$0xff]
  %v602 = vld [vmem:[%s1 + $0x70] sm:$0xff]
  %v603 = vld [vmem:[%s1 + $0x90] sm:$0xff]
  %v604 = vld [vmem:[%s1 + $0xb0] sm:$0xff]
  %v605 = vld [vmem:[%s1 + $0xd0] sm:$0xff]
  %v606 = vld [vmem:[%s1 + $0xf0] sm:$0xff]
  %v607 = vld [vmem:[%s1 + $0x110] sm:$0xff]
  %v608 = vld [vmem:[%s1 + $0x130] sm:$0xff]
  %v609 = vld [vmem:[%s1 + $0x150] sm:$0xff]
  %v610 = vld [vmem:[%s1 + $0x170] sm:$0xff]
  %v611 = vld [vmem:[%s1 + $0x190] sm:$0xff]
  %v612 = vld [vmem:[%s1 + $0x1b0] sm:$0xff]
  %v613 = vld [vmem:[%s1 + $0x1d0] sm:$0xff]
  %v614 = vld [vmem:[%s1 + $0x1f0] sm:$0xff]
  %v615 = vld [vmem:[%s1 + $0x210] sm:$0xff]
  %v616 = vld [vmem:[%s1 + $0x230] sm:$0xff]
  %v617 = vld [vmem:[%s1 + $0x250] sm:$0xff]
  %v618 = vld [vmem:[%s1 + $0x270] sm:$0xff]
  %v619 = vld [vmem:[%s1 + $0x290] sm:$0xff]
  %v620 = vld [vmem:[%s1 + $0x2b0] sm:$0xff]
  %v621 = vld [vmem:[%s1 + $0x2d0] sm:$0xff]
  %v622 = vld [vmem:[%s1 + $0x2f0] sm:$0xff]
  %v623 = vld [vmem:[%s1 + $0x310] sm:$0xff]
  %v624 = vld [vmem:[%s1 + $0x330] sm:$0xff]
  %v625 = vld [vmem:[%s1 + $0x350] sm:$0xff]
  %v626 = vld [vmem:[%s1 + $0x370] sm:$0xff]
  %v627 = vld [vmem:[%s1 + $0x390] sm:$0xff]
  %v628 = vld [vmem:[%s1 + $0x3b0] sm:$0xff]
  %v629 = vld [vmem:[%s1 + $0x3d0] sm:$0xff]
  %v630 = vld [vmem:[%s1 + $0x3f0] sm:$0xff]
  %v631 = vld [vmem:[%s3 + $0xc] sm:$0xf]
  %632 = vmatprep.subr.mxu0 0.0
  %633 = vmatpush1.msra.mxu0 %v599
  %634 = vmatprep.subr.mxu0 0.0
  %635 = vmatpush1.msra.mxu0 %v600
  %636 = vmatprep.subr.mxu0 0.0
  %637 = vmatpush1.msra.mxu0 %v601
  %638 = vmatprep.subr.mxu0 0.0
  %639 = vmatpush1.msra.mxu0 %v602
  %640 = vmatprep.subr.mxu0 0.0
  %641 = vmatpush1.msra.mxu0 %v603
  %642 = vmatprep.subr.mxu0 0.0
  %643 = vmatpush1.msra.mxu0 %v604
  %644 = vmatprep.subr.mxu0 0.0
  %645 = vmatpush1.msra.mxu0 %v605
  %646 = vmatprep.subr.mxu0 0.0
  %647 = vmatpush1.msra.mxu0 %v606
  %648 = vmatprep.subr.mxu0 0.0
  %649 = vmatpush1.msra.mxu0 %v607
  %650 = vmatprep.subr.mxu0 0.0
  %651 = vmatpush1.msra.mxu0 %v608
  %652 = vmatprep.subr.mxu0 0.0
  %653 = vmatpush1.msra.mxu0 %v609
  %654 = vmatprep.subr.mxu0 0.0
  %655 = vmatpush1.msra.mxu0 %v610
  %656 = vmatprep.subr.mxu0 0.0
  %657 = vmatpush1.msra.mxu0 %v611
  %658 = vmatprep.subr.mxu0 0.0
  %659 = vmatpush1.msra.mxu0 %v612
  %660 = vmatprep.subr.mxu0 0.0
  %661 = vmatpush1.msra.mxu0 %v613
  %662 = vmatprep.subr.mxu0 0.0
  %663 = vmatpush1.msra.mxu0 %v614
  %664 = vmatprep.subr.mxu0 0.0
  %665 = vmatpush1.msra.mxu0 %v615
  %666 = vmatprep.subr.mxu0 0.0
  %667 = vmatpush1.msra.mxu0 %v616
  %668 = vmatprep.subr.mxu0 0.0
  %669 = vmatpush1.msra.mxu0 %v617
  %670 = vmatprep.subr.mxu0 0.0
  %671 = vmatpush1.msra.mxu0 %v618
  %672 = vmatprep.subr.mxu0 0.0
  %673 = vmatpush1.msra.mxu0 %v619
  %674 = vmatprep.subr.mxu0 0.0
  %675 = vmatpush1.msra.mxu0 %v620
  %676 = vmatprep.subr.mxu0 0.0
  %677 = vmatpush1.msra.mxu0 %v621
  %678 = vmatprep.subr.mxu0 0.0
  %679 = vmatpush1.msra.mxu0 %v622
  %680 = vmatprep.subr.mxu0 0.0
  %681 = vmatpush1.msra.mxu0 %v623
  %682 = vmatprep.subr.mxu0 0.0
  %683 = vmatpush1.msra.mxu0 %v624
  %684 = vmatprep.subr.mxu0 0.0
  %685 = vmatpush1.msra.mxu0 %v625
  %686 = vmatprep.subr.mxu0 0.0
  %687 = vmatpush1.msra.mxu0 %v626
  %688 = vmatprep.subr.mxu0 0.0
  %689 = vmatpush1.msra.mxu0 %v627
  %690 = vmatprep.subr.mxu0 0.0
  %691 = vmatpush1.msra.mxu0 %v628
  %692 = vmatprep.subr.mxu0 0.0
  %693 = vmatpush1.msra.mxu0 %v629
  %694 = vmatprep.subr.mxu0 0.0
  %695 = vmatpush1.msra.mxu0 %v630
  %696 = vmatprep.mubr.f32.mxu0 %v598
  %697 = vmatmul.mubr.f32.gmra.mrb[0].mxu0 %v597
  %v698 = vpop.f32.mrb[0].mxu0
  %v699 = vadd.f32 %v631, %v698
  %v700 = vpop.f32.mrb[0].mxu0
  %701 = vdwg.mxu0
  %v702 = vmax.f32 %v699, 0.0
  %v703 = vld [vmem:[%s3 + $0x10] sm:$0xf]
  %v704 = vmul.f32 %v702, %v703
  %vm705 = vcmask 1043456
  %v706 = vsel %vm705, %v704, 0.0
  %707 = vadd.xlane.f32.xlu0 %v706
  %v708 = vpop.xlane.xlu0 %707
  %v709 = vand.u32 2147483647, %v708
  %v710 = vsub.f32 0.0, %v709
  %v711 = vmul.f32 %v710, 1.442695
  %v712 = vpow.pop %v711
  %v713 = vadd.f32 %v712, 1.0
  %v714 = vrcp.pop %v713
  %vm715 = vcmp.ge.f32.partialorder %v708, 0.0
  %v716 = vmul.f32 %v712, %v714
  %v717 = vsel %vm715, %v714, %v716
  %v718 = vmul.f32 %v596, %v717
  %v719 = vlaneseq
  %v720 = vand.u32 %v719, 127
  %v721 = vadd.s32 %v486, 2
  %vm722 = vcmp.ge.s32.totalorder %v721, 4
  %v723 = vsub.s32 %v721, 4
  %v724 = vsel %vm722, %v723, %v721
  %vm725 = vcmp.eq.s32.totalorder %v724, %v720
  %v726 = vsel %vm725, 1, 0
  %v727 = vcvt.s32.f32 %v726
  %v728 = vld [vmem:[%s2] sm:$0xff]
  %v729 = vld [vmem:[%s2 + $0x8] sm:$0xff]
  %v730 = vld [vmem:[%s2 + $0x10] sm:$0xff]
  %v731 = vld [vmem:[%s2 + $0x38] sm:$0xff]
  %v732 = vld [vmem:[%s2 + $0x40] sm:$0xff]
  %v733 = vld [vmem:[%s2 + $0x48] sm:$0xff]
  %v734 = vld [vmem:[%s2 + $0x70] sm:$0xff]
  %v735 = vld [vmem:[%s2 + $0x78] sm:$0xff]
  %v736 = vld [vmem:[%s2 + $0x80] sm:$0xff]
  %v737 = vld [vmem:[%s2 + $0xa8] sm:$0xff]
  %v738 = vld [vmem:[%s2 + $0xb0] sm:$0xff]
  %v739 = vld [vmem:[%s2 + $0xb8] sm:$0xff]
  %v740 = vld [vmem:[%s2 + $0xe0] sm:$0xff]
  %v741 = vld [vmem:[%s2 + $0xe8] sm:$0xff]
  %v742 = vld [vmem:[%s2 + $0xf0] sm:$0xff]
  %v743 = vld [vmem:[%s2 + $0x118] sm:$0xff]
  %v744 = vld [vmem:[%s2 + $0x120] sm:$0xff]
  %v745 = vld [vmem:[%s2 + $0x128] sm:$0xff]
  %v746 = vld [vmem:[%s2 + $0x150] sm:$0xff]
  %v747 = vld [vmem:[%s2 + $0x158] sm:$0xff]
  %v748 = vld [vmem:[%s2 + $0x160] sm:$0xff]
  %v749 = vld [vmem:[%s2 + $0x188] sm:$0xff]
  %v750 = vld [vmem:[%s2 + $0x190] sm:$0xff]
  %v751 = vld [vmem:[%s2 + $0x198] sm:$0xff]
  %v752 = vld [vmem:[%s2 + $0x1c0] sm:$0xff]
  %v753 = vld [vmem:[%s2 + $0x1c8] sm:$0xff]
  %v754 = vld [vmem:[%s2 + $0x1d0] sm:$0xff]
  %v755 = vld [vmem:[%s2 + $0x1f8] sm:$0xff]
  %v756 = vld [vmem:[%s2 + $0x200] sm:$0xff]
  %v757 = vld [vmem:[%s2 + $0x208] sm:$0xff]
  %v758 = vld [vmem:[%s2 + $0x230] sm:$0xff]
  %v759 = vld [vmem:[%s2 + $0x238] sm:$0xff]
  %v760 = vld [vmem:[%s2 + $0x240] sm:$0xff]
  %v761 = vld [vmem:[%s2 + $0x268] sm:$0xff]
  %v762 = vld [vmem:[%s2 + $0x270] sm:$0xff]
  %v763 = vld [vmem:[%s2 + $0x278] sm:$0xff]
  %v764 = vld [vmem:[%s2 + $0x2a0] sm:$0xff]
  %v765 = vld [vmem:[%s2 + $0x2a8] sm:$0xff]
  %v766 = vld [vmem:[%s2 + $0x2b0] sm:$0xff]
  %v767 = vld [vmem:[%s2 + $0x2d8] sm:$0xff]
  %v768 = vld [vmem:[%s2 + $0x2e0] sm:$0xff]
  %v769 = vld [vmem:[%s2 + $0x2e8] sm:$0xff]
  %v770 = vld [vmem:[%s2 + $0x310] sm:$0xff]
  %v771 = vld [vmem:[%s2 + $0x318] sm:$0xff]
  %v772 = vld [vmem:[%s2 + $0x320] sm:$0xff]
  %v773 = vld [vmem:[%s2 + $0x348] sm:$0xff]
  %v774 = vld [vmem:[%s2 + $0x350] sm:$0xff]
  %v775 = vld [vmem:[%s2 + $0x358] sm:$0xff]
  %v776 = vld [vmem:[%s3 + $0x14] sm:$0xff]
  %v777 = vld [vmem:[%s3 + $0x1c] sm:$0xf]
  %v779 = vcombine.high %v776, %v776
  %781 = vmatprep.subr.mxu0 %v729
  %782 = vmatpush1.msra.mxu0 %v728
  %783 = vmatprep.subr.mxu0 %v732
  %784 = vmatpush1.msra.mxu0 %v731
  %785 = vmatprep.subr.mxu0 %v735
  %786 = vmatpush1.msra.mxu0 %v734
  %787 = vmatprep.subr.mxu0 %v738
  %788 = vmatpush1.msra.mxu0 %v737
  %789 = vmatprep.subr.mxu0 %v741
  %790 = vmatpush1.msra.mxu0 %v740
  %791 = vmatprep.subr.mxu0 %v744
  %792 = vmatpush1.msra.mxu0 %v743
  %793 = vmatprep.subr.mxu0 %v747
  %794 = vmatpush1.msra.mxu0 %v746
  %795 = vmatprep.subr.mxu0 %v750
  %796 = vmatpush1.msra.mxu0 %v749
  %797 = vmatprep.subr.mxu0 %v753
  %798 = vmatpush1.msra.mxu0 %v752
  %799 = vmatprep.subr.mxu0 %v756
  %800 = vmatpush1.msra.mxu0 %v755
  %801 = vmatprep.subr.mxu0 %v759
  %802 = vmatpush1.msra.mxu0 %v758
  %803 = vmatprep.subr.mxu0 %v762
  %804 = vmatpush1.msra.mxu0 %v761
  %805 = vmatprep.subr.mxu0 %v765
  %806 = vmatpush1.msra.mxu0 %v764
  %807 = vmatprep.subr.mxu0 %v768
  %808 = vmatpush1.msra.mxu0 %v767
  %809 = vmatprep.subr.mxu0 %v771
  %810 = vmatpush1.msra.mxu0 %v770
  %811 = vmatprep.subr.mxu0 %v774
  %812 = vmatpush1.msra.mxu0 %v773
  %813 = vmatprep.subr.mxu0 0.0
  %814 = vmatpush1.msra.mxu0 0.0
  %815 = vmatprep.subr.mxu0 0.0
  %816 = vmatpush1.msra.mxu0 0.0
  %817 = vmatprep.subr.mxu0 0.0
  %818 = vmatpush1.msra.mxu0 0.0
  %819 = vmatprep.subr.mxu0 0.0
  %820 = vmatpush1.msra.mxu0 0.0
  %821 = vmatprep.subr.mxu0 0.0
  %822 = vmatpush1.msra.mxu0 0.0
  %823 = vmatprep.subr.mxu0 0.0
  %824 = vmatpush1.msra.mxu0 0.0
  %825 = vmatprep.subr.mxu0 0.0
  %826 = vmatpush1.msra.mxu0 0.0
  %827 = vmatprep.subr.mxu0 0.0
  %828 = vmatpush1.msra.mxu0 0.0
  %829 = vmatprep.subr.mxu0 0.0
  %830 = vmatpush1.msra.mxu0 0.0
  %831 = vmatprep.subr.mxu0 0.0
  %832 = vmatpush1.msra.mxu0 0.0
  %833 = vmatprep.subr.mxu0 0.0
  %834 = vmatpush1.msra.mxu0 0.0
  %835 = vmatprep.subr.mxu0 0.0
  %836 = vmatpush1.msra.mxu0 0.0
  %837 = vmatprep.subr.mxu0 0.0
  %838 = vmatpush1.msra.mxu0 0.0
  %839 = vmatprep.subr.mxu0 0.0
  %840 = vmatpush1.msra.mxu0 0.0
  %841 = vmatprep.subr.mxu0 0.0
  %842 = vmatpush1.msra.mxu0 0.0
  %843 = vmatprep.subr.mxu0 0.0
  %844 = vmatpush1.msra.mxu0 0.0
  %845 = vmatprep.mubr.f32.mxu0 0.0
  %846 = vmatmul.mubr.f32.gmra.mrb[0].mxu0 %v718
  %v847 = vpop.f32.mrb[0].mxu0
  %v848 = vadd.f32 %v776, %v847
  %v849 = vpop.f32.mrb[0].mxu0
  %v850 = vadd.f32 %v779, %v849
  %851 = vdwg.mxu0
  %852 = vmatprep.subr.mxu0 0.0
  %853 = vmatpush1.msra.mxu0 %v730
  %854 = vmatprep.subr.mxu0 0.0
  %855 = vmatpush1.msra.mxu0 %v733
  %856 = vmatprep.subr.mxu0 0.0
  %857 = vmatpush1.msra.mxu0 %v736
  %858 = vmatprep.subr.mxu0 0.0
  %859 = vmatpush1.msra.mxu0 %v739
  %860 = vmatprep.subr.mxu0 0.0
  %861 = vmatpush1.msra.mxu0 %v742
  %862 = vmatprep.subr.mxu0 0.0
  %863 = vmatpush1.msra.mxu0 %v745
  %864 = vmatprep.subr.mxu0 0.0
  %865 = vmatpush1.msra.mxu0 %v748
  %866 = vmatprep.subr.mxu0 0.0
  %867 = vmatpush1.msra.mxu0 %v751
  %868 = vmatprep.subr.mxu0 0.0
  %869 = vmatpush1.msra.mxu0 %v754
  %870 = vmatprep.subr.mxu0 0.0
  %871 = vmatpush1.msra.mxu0 %v757
  %872 = vmatprep.subr.mxu0 0.0
  %873 = vmatpush1.msra.mxu0 %v760
  %874 = vmatprep.subr.mxu0 0.0
  %875 = vmatpush1.msra.mxu0 %v763
  %876 = vmatprep.subr.mxu0 0.0
  %877 = vmatpush1.msra.mxu0 %v766
  %878 = vmatprep.subr.mxu0 0.0
  %879 = vmatpush1.msra.mxu0 %v769
  %880 = vmatprep.subr.mxu0 0.0
  %881 = vmatpush1.msra.mxu0 %v772
  %882 = vmatprep.subr.mxu0 0.0
  %883 = vmatpush1.msra.mxu0 %v775
  %884 = vmatprep.subr.mxu0 0.0
  %885 = vmatpush1.msra.mxu0 0.0
  %886 = vmatprep.subr.mxu0 0.0
  %887 = vmatpush1.msra.mxu0 0.0
  %888 = vmatprep.subr.mxu0 0.0
  %889 = vmatpush1.msra.mxu0 0.0
  %890 = vmatprep.subr.mxu0 0.0
  %891 = vmatpush1.msra.mxu0 0.0
  %892 = vmatprep.subr.mxu0 0.0
  %893 = vmatpush1.msra.mxu0 0.0
  %894 = vmatprep.subr.mxu0 0.0
  %895 = vmatpush1.msra.mxu0 0.0
  %896 = vmatprep.subr.mxu0 0.0
  %897 = vmatpush1.msra.mxu0 0.0
  %898 = vmatprep.subr.mxu0 0.0
  %899 = vmatpush1.msra.mxu0 0.0
  %900 = vmatprep.subr.mxu0 0.0
  %901 = vmatpush1.msra.mxu0 0.0
  %902 = vmatprep.subr.mxu0 0.0
  %903 = vmatpush1.msra.mxu0 0.0
  %904 = vmatprep.subr.mxu0 0.0
  %905 = vmatpush1.msra.mxu0 0.0
  %906 = vmatprep.subr.mxu0 0.0
  %907 = vmatpush1.msra.mxu0 0.0
  %908 = vmatprep.subr.mxu0 0.0
  %909 = vmatpush1.msra.mxu0 0.0
  %910 = vmatprep.subr.mxu0 0.0
  %911 = vmatpush1.msra.mxu0 0.0
  %912 = vmatprep.subr.mxu0 0.0
  %913 = vmatpush1.msra.mxu0 0.0
  %914 = vmatprep.subr.mxu0 0.0
  %915 = vmatpush1.msra.mxu0 0.0
  %916 = vmatprep.mubr.f32.mxu0 0.0
  %917 = vmatmul.mubr.f32.gmra.mrb[0].mxu0 %v718
  %v918 = vpop.f32.mrb[0].mxu0
  %v919 = vadd.f32 %v777, %v918
  %v920 = vpop.f32.mrb[0].mxu0
  %921 = vdwg.mxu0
  %vm922 = vcmask 31744
  %v924 = vsel %vm922, %v727, 0
  %v927 = vsel %vm705, %v850, 0
  %v930 = vsel %vm705, %v919, 0
  %932 = vmatprep.subr.mxu0 %v930
  %933 = vmatpush1.msra.mxu0 %v927
  %934 = vmatprep.subr.mxu0 0.0
  %935 = vmatpush1.msra.mxu0 0.0
  %936 = vmatprep.subr.mxu0 0.0
  %937 = vmatpush1.msra.mxu0 0.0
  %938 = vmatprep.subr.mxu0 0.0
  %939 = vmatpush1.msra.mxu0 0.0
  %940 = vmatprep.subr.mxu0 0.0
  %941 = vmatpush1.msra.mxu0 0.0
  %942 = vmatprep.subr.mxu0 0.0
  %943 = vmatpush1.msra.mxu0 0.0
  %944 = vmatprep.subr.mxu0 0.0
  %945 = vmatpush1.msra.mxu0 0.0
  %946 = vmatprep.subr.mxu0 0.0
  %947 = vmatpush1.msra.mxu0 0.0
  %948 = vmatprep.subr.mxu0 0.0
  %949 = vmatpush1.msra.mxu0 0.0
  %950 = vmatprep.subr.mxu0 0.0
  %951 = vmatpush1.msra.mxu0 0.0
  %952 = vmatprep.subr.mxu0 0.0
  %953 = vmatpush1.msra.mxu0 0.0
  %954 = vmatprep.subr.mxu0 0.0
  %955 = vmatpush1.msra.mxu0 0.0
  %956 = vmatprep.subr.mxu0 0.0
  %957 = vmatpush1.msra.mxu0 0.0
  %958 = vmatprep.subr.mxu0 0.0
  %959 = vmatpush1.msra.mxu0 0.0
  %960 = vmatprep.subr.mxu0 0.0
  %961 = vmatpush1.msra.mxu0 0.0
  %962 = vmatprep.subr.mxu0 0.0
  %963 = vmatpush1.msra.mxu0 0.0
  %964 = vmatprep.subr.mxu0 0.0
  %965 = vmatpush1.msra.mxu0 0.0
  %966 = vmatprep.subr.mxu0 0.0
  %967 = vmatpush1.msra.mxu0 0.0
  %968 = vmatprep.subr.mxu0 0.0
  %969 = vmatpush1.msra.mxu0 0.0
  %970 = vmatprep.subr.mxu0 0.0
  %971 = vmatpush1.msra.mxu0 0.0
  %972 = vmatprep.subr.mxu0 0.0
  %973 = vmatpush1.msra.mxu0 0.0
  %974 = vmatprep.subr.mxu0 0.0
  %975 = vmatpush1.msra.mxu0 0.0
  %976 = vmatprep.subr.mxu0 0.0
  %977 = vmatpush1.msra.mxu0 0.0
  %978 = vmatprep.subr.mxu0 0.0
  %979 = vmatpush1.msra.mxu0 0.0
  %980 = vmatprep.subr.mxu0 0.0
  %981 = vmatpush1.msra.mxu0 0.0
  %982 = vmatprep.subr.mxu0 0.0
  %983 = vmatpush1.msra.mxu0 0.0
  %984 = vmatprep.subr.mxu0 0.0
  %985 = vmatpush1.msra.mxu0 0.0
  %986 = vmatprep.subr.mxu0 0.0
  %987 = vmatpush1.msra.mxu0 0.0
  %988 = vmatprep.subr.mxu0 0.0
  %989 = vmatpush1.msra.mxu0 0.0
  %990 = vmatprep.subr.mxu0 0.0
  %991 = vmatpush1.msra.mxu0 0.0
  %992 = vmatprep.subr.mxu0 0.0
  %993 = vmatpush1.msra.mxu0 0.0
  %994 = vmatprep.subr.mxu0 0.0
  %995 = vmatpush1.msra.mxu0 0.0
  %996 = vmatprep.mubr.f32.mxu0 0.0
  %997 = vmatmul.mubr.f32.gmra.mrb[0].mxu0 %v924
  %v998 = vpop.f32.mrb[0].mxu0
  %v999 = vadd.f32 0.0, %v998
  %v1000 = vpop.f32.mrb[0].mxu0
  %v1001 = vadd.f32 0.0, %v1000
  %1002 = vdwg.mxu0
  %v1003 = vld [vmem:[%s2 + $0x30] sm:$0xff]
  %v1004 = vld [vmem:[%s2 + $0x68] sm:$0xff]
  %v1005 = vld [vmem:[%s2 + $0xa0] sm:$0xff]
  %v1006 = vld [vmem:[%s2 + $0xd8] sm:$0xff]
  %v1007 = vld [vmem:[%s2 + $0x110] sm:$0xff]
  %v1008 = vld [vmem:[%s2 + $0x148] sm:$0xff]
  %v1009 = vld [vmem:[%s2 + $0x180] sm:$0xff]
  %v1010 = vld [vmem:[%s2 + $0x1b8] sm:$0xff]
  %v1011 = vld [vmem:[%s2 + $0x1f0] sm:$0xff]
  %v1012 = vld [vmem:[%s2 + $0x228] sm:$0xff]
  %v1013 = vld [vmem:[%s2 + $0x260] sm:$0xff]
  %v1014 = vld [vmem:[%s2 + $0x298] sm:$0xff]
  %v1015 = vld [vmem:[%s2 + $0x2d0] sm:$0xff]
  %v1016 = vld [vmem:[%s2 + $0x308] sm:$0xff]
  %v1017 = vld [vmem:[%s2 + $0x340] sm:$0xff]
  %v1018 = vld [vmem:[%s2 + $0x378] sm:$0xff]
  %v1019 = vmul.f32 %v848, %v850
  %1020 = vmatprep.subr.mxu0 0.0
  %1021 = vmatpush1.msra.mxu0 %v1003
  %1022 = vmatprep.subr.mxu0 0.0
  %1023 = vmatpush1.msra.mxu0 %v1004
  %1024 = vmatprep.subr.mxu0 0.0
  %1025 = vmatpush1.msra.mxu0 %v1005
  %1026 = vmatprep.subr.mxu0 0.0
  %1027 = vmatpush1.msra.mxu0 %v1006
  %1028 = vmatprep.subr.mxu0 0.0
  %1029 = vmatpush1.msra.mxu0 %v1007
  %1030 = vmatprep.subr.mxu0 0.0
  %1031 = vmatpush1.msra.mxu0 %v1008
  %1032 = vmatprep.subr.mxu0 0.0
  %1033 = vmatpush1.msra.mxu0 %v1009
  %1034 = vmatprep.subr.mxu0 0.0
  %1035 = vmatpush1.msra.mxu0 %v1010
  %1036 = vmatprep.subr.mxu0 0.0
  %1037 = vmatpush1.msra.mxu0 %v1011
  %1038 = vmatprep.subr.mxu0 0.0
  %1039 = vmatpush1.msra.mxu0 %v1012
  %1040 = vmatprep.subr.mxu0 0.0
  %1041 = vmatpush1.msra.mxu0 %v1013
  %1042 = vmatprep.subr.mxu0 0.0
  %1043 = vmatpush1.msra.mxu0 %v1014
  %1044 = vmatprep.subr.mxu0 0.0
  %1045 = vmatpush1.msra.mxu0 %v1015
  %1046 = vmatprep.subr.mxu0 0.0
  %1047 = vmatpush1.msra.mxu0 %v1016
  %1048 = vmatprep.subr.mxu0 0.0
  %1049 = vmatpush1.msra.mxu0 %v1017
  %1050 = vmatprep.subr.mxu0 0.0
  %1051 = vmatpush1.msra.mxu0 %v1018
  %1052 = vmatprep.subr.mxu0 0.0
  %1053 = vmatpush1.msra.mxu0 0.0
  %1054 = vmatprep.subr.mxu0 0.0
  %1055 = vmatpush1.msra.mxu0 0.0
  %1056 = vmatprep.subr.mxu0 0.0
  %1057 = vmatpush1.msra.mxu0 0.0
  %1058 = vmatprep.subr.mxu0 0.0
  %1059 = vmatpush1.msra.mxu0 0.0
  %1060 = vmatprep.subr.mxu0 0.0
  %1061 = vmatpush1.msra.mxu0 0.0
  %1062 = vmatprep.subr.mxu0 0.0
  %1063 = vmatpush1.msra.mxu0 0.0
  %1064 = vmatprep.subr.mxu0 0.0
  %1065 = vmatpush1.msra.mxu0 0.0
  %1066 = vmatprep.subr.mxu0 0.0
  %1067 = vmatpush1.msra.mxu0 0.0
  %1068 = vmatprep.subr.mxu0 0.0
  %1069 = vmatpush1.msra.mxu0 0.0
  %1070 = vmatprep.subr.mxu0 0.0
  %1071 = vmatpush1.msra.mxu0 0.0
  %1072 = vmatprep.subr.mxu0 0.0
  %1073 = vmatpush1.msra.mxu0 0.0
  %1074 = vmatprep.subr.mxu0 0.0
  %1075 = vmatpush1.msra.mxu0 0.0
  %1076 = vmatprep.subr.mxu0 0.0
  %1077 = vmatpush1.msra.mxu0 0.0
  %1078 = vmatprep.subr.mxu0 0.0
  %1079 = vmatpush1.msra.mxu0 0.0
  %1080 = vmatprep.subr.mxu0 0.0
  %1081 = vmatpush1.msra.mxu0 0.0
  %1082 = vmatprep.subr.mxu0 0.0
  %1083 = vmatpush1.msra.mxu0 0.0
  %1084 = vmatprep.mubr.f32.mxu0 0.0
  %1085 = vmatmul.mubr.f32.gmra.mrb[0].mxu0 %v1019
  %v1086 = vpop.f32.mrb[0].mxu0
  %v1087 = vadd.f32 0.0, %v1086
  %v1088 = vpop.f32.mrb[0].mxu0
  %1089 = vdwg.mxu0
  %v1090 = vmul.f32 %v848, %v999
  %1091 = vmatprep.subr.mxu0 0.0
  %1092 = vmatpush1.msra.mxu0 %v1003
  %1093 = vmatprep.subr.mxu0 0.0
  %1094 = vmatpush1.msra.mxu0 %v1004
  %1095 = vmatprep.subr.mxu0 0.0
  %1096 = vmatpush1.msra.mxu0 %v1005
  %1097 = vmatprep.subr.mxu0 0.0
  %1098 = vmatpush1.msra.mxu0 %v1006
  %1099 = vmatprep.subr.mxu0 0.0
  %1100 = vmatpush1.msra.mxu0 %v1007
  %1101 = vmatprep.subr.mxu0 0.0
  %1102 = vmatpush1.msra.mxu0 %v1008
  %1103 = vmatprep.subr.mxu0 0.0
  %1104 = vmatpush1.msra.mxu0 %v1009
  %1105 = vmatprep.subr.mxu0 0.0
  %1106 = vmatpush1.msra.mxu0 %v1010
  %1107 = vmatprep.subr.mxu0 0.0
  %1108 = vmatpush1.msra.mxu0 %v1011
  %1109 = vmatprep.subr.mxu0 0.0
  %1110 = vmatpush1.msra.mxu0 %v1012
  %1111 = vmatprep.subr.mxu0 0.0
  %1112 = vmatpush1.msra.mxu0 %v1013
  %1113 = vmatprep.subr.mxu0 0.0
  %1114 = vmatpush1.msra.mxu0 %v1014
  %1115 = vmatprep.subr.mxu0 0.0
  %1116 = vmatpush1.msra.mxu0 %v1015
  %1117 = vmatprep.subr.mxu0 0.0
  %1118 = vmatpush1.msra.mxu0 %v1016
  %1119 = vmatprep.subr.mxu0 0.0
  %1120 = vmatpush1.msra.mxu0 %v1017
  %1121 = vmatprep.subr.mxu0 0.0
  %1122 = vmatpush1.msra.mxu0 %v1018
  %1123 = vmatprep.subr.mxu0 0.0
  %1124 = vmatpush1.msra.mxu0 0.0
  %1125 = vmatprep.subr.mxu0 0.0
  %1126 = vmatpush1.msra.mxu0 0.0
  %1127 = vmatprep.subr.mxu0 0.0
  %1128 = vmatpush1.msra.mxu0 0.0
  %1129 = vmatprep.subr.mxu0 0.0
  %1130 = vmatpush1.msra.mxu0 0.0
  %1131 = vmatprep.subr.mxu0 0.0
  %1132 = vmatpush1.msra.mxu0 0.0
  %1133 = vmatprep.subr.mxu0 0.0
  %1134 = vmatpush1.msra.mxu0 0.0
  %1135 = vmatprep.subr.mxu0 0.0
  %1136 = vmatpush1.msra.mxu0 0.0
  %1137 = vmatprep.subr.mxu0 0.0
  %1138 = vmatpush1.msra.mxu0 0.0
  %1139 = vmatprep.subr.mxu0 0.0
  %1140 = vmatpush1.msra.mxu0 0.0
  %1141 = vmatprep.subr.mxu0 0.0
  %1142 = vmatpush1.msra.mxu0 0.0
  %1143 = vmatprep.subr.mxu0 0.0
  %1144 = vmatpush1.msra.mxu0 0.0
  %1145 = vmatprep.subr.mxu0 0.0
  %1146 = vmatpush1.msra.mxu0 0.0
  %1147 = vmatprep.subr.mxu0 0.0
  %1148 = vmatpush1.msra.mxu0 0.0
  %1149 = vmatprep.subr.mxu0 0.0
  %1150 = vmatpush1.msra.mxu0 0.0
  %1151 = vmatprep.subr.mxu0 0.0
  %1152 = vmatpush1.msra.mxu0 0.0
  %1153 = vmatprep.subr.mxu0 0.0
  %1154 = vmatpush1.msra.mxu0 0.0
  %1155 = vmatprep.mubr.f32.mxu0 0.0
  %1156 = vmatmul.mubr.f32.gmra.mrb[0].mxu0 %v1090
  %v1157 = vpop.f32.mrb[0].mxu0
  %v1158 = vadd.f32 0.0, %v1157
  %v1159 = vpop.f32.mrb[0].mxu0
  %1160 = vdwg.mxu0
  %v1161 = vmax.f32 %v1087, %v1158
  %v1162 = vsub.f32 %v1087, %v1161
  %v1163 = vmul.f32 %v1162, 1.442695
  %v1164 = vpow.pop %v1163
  %v1165 = vsub.f32 %v1158, %v1161
  %v1166 = vmul.f32 %v1165, 1.442695
  %v1167 = vpow.pop %v1166
  %v1168 = vadd.f32 %v1164, %v1167
  %v1169 = vrcp.pop %v1168
  %v1170 = vmul.f32 %v1164, %v1169
  %v1171 = vmul.f32 %v1170, %v919
  %v1172 = vmul.f32 %v1167, %v1169
  %v1173 = vmul.f32 %v1172, %v1001
  %v1174 = vadd.f32 %v1171, %v1173
  %v1175 = vld [vmem:[%s2 + $0x18] sm:$0xff]
  %v1176 = vld [vmem:[%s2 + $0x50] sm:$0xff]
  %v1177 = vld [vmem:[%s2 + $0x88] sm:$0xff]
  %v1178 = vld [vmem:[%s2 + $0xc0] sm:$0xff]
  %v1179 = vld [vmem:[%s2 + $0xf8] sm:$0xff]
  %v1180 = vld [vmem:[%s2 + $0x130] sm:$0xff]
  %v1181 = vld [vmem:[%s2 + $0x168] sm:$0xff]
  %v1182 = vld [vmem:[%s2 + $0x1a0] sm:$0xff]
  %v1183 = vld [vmem:[%s2 + $0x1d8] sm:$0xff]
  %v1184 = vld [vmem:[%s2 + $0x210] sm:$0xff]
  %v1185 = vld [vmem:[%s2 + $0x248] sm:$0xff]
  %v1186 = vld [vmem:[%s2 + $0x280] sm:$0xff]
  %v1187 = vld [vmem:[%s2 + $0x2b8] sm:$0xff]
  %v1188 = vld [vmem:[%s2 + $0x2f0] sm:$0xff]
  %v1189 = vld [vmem:[%s2 + $0x328] sm:$0xff]
  %v1190 = vld [vmem:[%s2 + $0x360] sm:$0xff]
  %v1191 = vld [vmem:[%s3 + $0x20] sm:$0xf]
  %1192 = vmatprep.subr.mxu0 0.0
  %1193 = vmatpush1.msra.mxu0 %v1175
  %1194 = vmatprep.subr.mxu0 0.0
  %1195 = vmatpush1.msra.mxu0 %v1176
  %1196 = vmatprep.subr.mxu0 0.0
  %1197 = vmatpush1.msra.mxu0 %v1177
  %1198 = vmatprep.subr.mxu0 0.0
  %1199 = vmatpush1.msra.mxu0 %v1178
  %1200 = vmatprep.subr.mxu0 0.0
  %1201 = vmatpush1.msra.mxu0 %v1179
  %1202 = vmatprep.subr.mxu0 0.0
  %1203 = vmatpush1.msra.mxu0 %v1180
  %1204 = vmatprep.subr.mxu0 0.0
  %1205 = vmatpush1.msra.mxu0 %v1181
  %1206 = vmatprep.subr.mxu0 0.0
  %1207 = vmatpush1.msra.mxu0 %v1182
  %1208 = vmatprep.subr.mxu0 0.0
  %1209 = vmatpush1.msra.mxu0 %v1183
  %1210 = vmatprep.subr.mxu0 0.0
  %1211 = vmatpush1.msra.mxu0 %v1184
  %1212 = vmatprep.subr.mxu0 0.0
  %1213 = vmatpush1.msra.mxu0 %v1185
  %1214 = vmatprep.subr.mxu0 0.0
  %1215 = vmatpush1.msra.mxu0 %v1186
  %1216 = vmatprep.subr.mxu0 0.0
  %1217 = vmatpush1.msra.mxu0 %v1187
  %1218 = vmatprep.subr.mxu0 0.0
  %1219 = vmatpush1.msra.mxu0 %v1188
  %1220 = vmatprep.subr.mxu0 0.0
  %1221 = vmatpush1.msra.mxu0 %v1189
  %1222 = vmatprep.subr.mxu0 0.0
  %1223 = vmatpush1.msra.mxu0 %v1190
  %1224 = vmatprep.subr.mxu0 0.0
  %1225 = vmatpush1.msra.mxu0 0.0
  %1226 = vmatprep.subr.mxu0 0.0
  %1227 = vmatpush1.msra.mxu0 0.0
  %1228 = vmatprep.subr.mxu0 0.0
  %1229 = vmatpush1.msra.mxu0 0.0
  %1230 = vmatprep.subr.mxu0 0.0
  %1231 = vmatpush1.msra.mxu0 0.0
  %1232 = vmatprep.subr.mxu0 0.0
  %1233 = vmatpush1.msra.mxu0 0.0
  %1234 = vmatprep.subr.mxu0 0.0
  %1235 = vmatpush1.msra.mxu0 0.0
  %1236 = vmatprep.subr.mxu0 0.0
  %1237 = vmatpush1.msra.mxu0 0.0
  %1238 = vmatprep.subr.mxu0 0.0
  %1239 = vmatpush1.msra.mxu0 0.0
  %1240 = vmatprep.subr.mxu0 0.0
  %1241 = vmatpush1.msra.mxu0 0.0
  %1242 = vmatprep.subr.mxu0 0.0
  %1243 = vmatpush1.msra.mxu0 0.0
  %1244 = vmatprep.subr.mxu0 0.0
  %1245 = vmatpush1.msra.mxu0 0.0
  %1246 = vmatprep.subr.mxu0 0.0
  %1247 = vmatpush1.msra.mxu0 0.0
  %1248 = vmatprep.subr.mxu0 0.0
  %1249 = vmatpush1.msra.mxu0 0.0
  %1250 = vmatprep.subr.mxu0 0.0
  %1251 = vmatpush1.msra.mxu0 0.0
  %1252 = vmatprep.subr.mxu0 0.0
  %1253 = vmatpush1.msra.mxu0 0.0
  %1254 = vmatprep.subr.mxu0 0.0
  %1255 = vmatpush1.msra.mxu0 0.0
  %1256 = vmatprep.mubr.f32.mxu0 0.0
  %1257 = vmatmul.mubr.f32.gmra.mrb[0].mxu0 %v1174
  %v1258 = vpop.f32.mrb[0].mxu0
  %v1259 = vadd.f32 %v1191, %v1258
  %v1260 = vpop.f32.mrb[0].mxu0
  %1261 = vdwg.mxu0
  %v1263 = vsel %vm705, %v1259, 0
  %1265 = vmatprep.subr.mxu0 0.0
  %1266 = vmatpush1.msra.mxu0 %v1263
  %1267 = vmatprep.subr.mxu0 0.0
  %1268 = vmatpush1.msra.mxu0 0.0
  %1269 = vmatprep.subr.mxu0 0.0
  %1270 = vmatpush1.msra.mxu0 0.0
  %1271 = vmatprep.subr.mxu0 0.0
  %1272 = vmatpush1.msra.mxu0 0.0
  %1273 = vmatprep.subr.mxu0 0.0
  %1274 = vmatpush1.msra.mxu0 0.0
  %1275 = vmatprep.subr.mxu0 0.0
  %1276 = vmatpush1.msra.mxu0 0.0
  %1277 = vmatprep.subr.mxu0 0.0
  %1278 = vmatpush1.msra.mxu0 0.0
  %1279 = vmatprep.subr.mxu0 0.0
  %1280 = vmatpush1.msra.mxu0 0.0
  %1281 = vmatprep.subr.mxu0 0.0
  %1282 = vmatpush1.msra.mxu0 0.0
  %1283 = vmatprep.subr.mxu0 0.0
  %1284 = vmatpush1.msra.mxu0 0.0
  %1285 = vmatprep.subr.mxu0 0.0
  %1286 = vmatpush1.msra.mxu0 0.0
  %1287 = vmatprep.subr.mxu0 0.0
  %1288 = vmatpush1.msra.mxu0 0.0
  %1289 = vmatprep.subr.mxu0 0.0
  %1290 = vmatpush1.msra.mxu0 0.0
  %1291 = vmatprep.subr.mxu0 0.0
  %1292 = vmatpush1.msra.mxu0 0.0
  %1293 = vmatprep.subr.mxu0 0.0
  %1294 = vmatpush1.msra.mxu0 0.0
  %1295 = vmatprep.subr.mxu0 0.0
  %1296 = vmatpush1.msra.mxu0 0.0
  %1297 = vmatprep.subr.mxu0 0.0
  %1298 = vmatpush1.msra.mxu0 0.0
  %1299 = vmatprep.subr.mxu0 0.0
  %1300 = vmatpush1.msra.mxu0 0.0
  %1301 = vmatprep.subr.mxu0 0.0
  %1302 = vmatpush1.msra.mxu0 0.0
  %1303 = vmatprep.subr.mxu0 0.0
  %1304 = vmatpush1.msra.mxu0 0.0
  %1305 = vmatprep.subr.mxu0 0.0
  %1306 = vmatpush1.msra.mxu0 0.0
  %1307 = vmatprep.subr.mxu0 0.0
  %1308 = vmatpush1.msra.mxu0 0.0
  %1309 = vmatprep.subr.mxu0 0.0
  %1310 = vmatpush1.msra.mxu0 0.0
  %1311 = vmatprep.subr.mxu0 0.0
  %1312 = vmatpush1.msra.mxu0 0.0
  %1313 = vmatprep.subr.mxu0 0.0
  %1314 = vmatpush1.msra.mxu0 0.0
  %1315 = vmatprep.subr.mxu0 0.0
  %1316 = vmatpush1.msra.mxu0 0.0
  %1317 = vmatprep.subr.mxu0 0.0
  %1318 = vmatpush1.msra.mxu0 0.0
  %1319 = vmatprep.subr.mxu0 0.0
  %1320 = vmatpush1.msra.mxu0 0.0
  %1321 = vmatprep.subr.mxu0 0.0
  %1322 = vmatpush1.msra.mxu0 0.0
  %1323 = vmatprep.subr.mxu0 0.0
  %1324 = vmatpush1.msra.mxu0 0.0
  %1325 = vmatprep.subr.mxu0 0.0
  %1326 = vmatpush1.msra.mxu0 0.0
  %1327 = vmatprep.subr.mxu0 0.0
  %1328 = vmatpush1.msra.mxu0 0.0
  %1329 = vmatprep.mubr.f32.mxu0 0.0
  %1330 = vmatmul.mubr.f32.gmra.mrb[0].mxu0 %v924
  %v1331 = vpop.f32.mrb[0].mxu0
  %v1332 = vadd.f32 0.0, %v1331
  %v1333 = vpop.f32.mrb[0].mxu0
  %1334 = vdwg.mxu0
  %v1335 = vld [vmem:[%s1 + $0x18] sm:$0xff]
  %v1336 = vld [vmem:[%s1 + $0x38] sm:$0xff]
  %v1337 = vld [vmem:[%s1 + $0x58] sm:$0xff]
  %v1338 = vld [vmem:[%s1 + $0x78] sm:$0xff]
  %v1339 = vld [vmem:[%s1 + $0x98] sm:$0xff]
  %v1340 = vld [vmem:[%s1 + $0xb8] sm:$0xff]
  %v1341 = vld [vmem:[%s1 + $0xd8] sm:$0xff]
  %v1342 = vld [vmem:[%s1 + $0xf8] sm:$0xff]
  %v1343 = vld [vmem:[%s1 + $0x118] sm:$0xff]
  %v1344 = vld [vmem:[%s1 + $0x138] sm:$0xff]
  %v1345 = vld [vmem:[%s1 + $0x158] sm:$0xff]
  %v1346 = vld [vmem:[%s1 + $0x178] sm:$0xff]
  %v1347 = vld [vmem:[%s1 + $0x198] sm:$0xff]
  %v1348 = vld [vmem:[%s1 + $0x1b8] sm:$0xff]
  %v1349 = vld [vmem:[%s1 + $0x1d8] sm:$0xff]
  %v1350 = vld [vmem:[%s1 + $0x1f8] sm:$0xff]
  %v1351 = vld [vmem:[%s1 + $0x218] sm:$0xff]
  %v1352 = vld [vmem:[%s1 + $0x238] sm:$0xff]
  %v1353 = vld [vmem:[%s1 + $0x258] sm:$0xff]
  %v1354 = vld [vmem:[%s1 + $0x278] sm:$0xff]
  %v1355 = vld [vmem:[%s1 + $0x298] sm:$0xff]
  %v1356 = vld [vmem:[%s1 + $0x2b8] sm:$0xff]
  %v1357 = vld [vmem:[%s1 + $0x2d8] sm:$0xff]
  %v1358 = vld [vmem:[%s1 + $0x2f8] sm:$0xff]
  %v1359 = vld [vmem:[%s1 + $0x318] sm:$0xff]
  %v1360 = vld [vmem:[%s1 + $0x338] sm:$0xff]
  %v1361 = vld [vmem:[%s1 + $0x358] sm:$0xff]
  %v1362 = vld [vmem:[%s1 + $0x378] sm:$0xff]
  %v1363 = vld [vmem:[%s1 + $0x398] sm:$0xff]
  %v1364 = vld [vmem:[%s1 + $0x3b8] sm:$0xff]
  %v1365 = vld [vmem:[%s1 + $0x3d8] sm:$0xff]
  %v1366 = vld [vmem:[%s1 + $0x3f8] sm:$0xff]
  %v1367 = vld [vmem:[%s3 + $0x24] sm:$0xf]
  %1368 = vmatprep.subr.mxu0 0.0
  %1369 = vmatpush1.msra.mxu0 %v1335
  %1370 = vmatprep.subr.mxu0 0.0
  %1371 = vmatpush1.msra.mxu0 %v1336
  %1372 = vmatprep.subr.mxu0 0.0
  %1373 = vmatpush1.msra.mxu0 %v1337
  %1374 = vmatprep.subr.mxu0 0.0
  %1375 = vmatpush1.msra.mxu0 %v1338
  %1376 = vmatprep.subr.mxu0 0.0
  %1377 = vmatpush1.msra.mxu0 %v1339
  %1378 = vmatprep.subr.mxu0 0.0
  %1379 = vmatpush1.msra.mxu0 %v1340
  %1380 = vmatprep.subr.mxu0 0.0
  %1381 = vmatpush1.msra.mxu0 %v1341
  %1382 = vmatprep.subr.mxu0 0.0
  %1383 = vmatpush1.msra.mxu0 %v1342
  %1384 = vmatprep.subr.mxu0 0.0
  %1385 = vmatpush1.msra.mxu0 %v1343
  %1386 = vmatprep.subr.mxu0 0.0
  %1387 = vmatpush1.msra.mxu0 %v1344
  %1388 = vmatprep.subr.mxu0 0.0
  %1389 = vmatpush1.msra.mxu0 %v1345
  %1390 = vmatprep.subr.mxu0 0.0
  %1391 = vmatpush1.msra.mxu0 %v1346
  %1392 = vmatprep.subr.mxu0 0.0
  %1393 = vmatpush1.msra.mxu0 %v1347
  %1394 = vmatprep.subr.mxu0 0.0
  %1395 = vmatpush1.msra.mxu0 %v1348
  %1396 = vmatprep.subr.mxu0 0.0
  %1397 = vmatpush1.msra.mxu0 %v1349
  %1398 = vmatprep.subr.mxu0 0.0
  %1399 = vmatpush1.msra.mxu0 %v1350
  %1400 = vmatprep.subr.mxu0 0.0
  %1401 = vmatpush1.msra.mxu0 %v1351
  %1402 = vmatprep.subr.mxu0 0.0
  %1403 = vmatpush1.msra.mxu0 %v1352
  %1404 = vmatprep.subr.mxu0 0.0
  %1405 = vmatpush1.msra.mxu0 %v1353
  %1406 = vmatprep.subr.mxu0 0.0
  %1407 = vmatpush1.msra.mxu0 %v1354
  %1408 = vmatprep.subr.mxu0 0.0
  %1409 = vmatpush1.msra.mxu0 %v1355
  %1410 = vmatprep.subr.mxu0 0.0
  %1411 = vmatpush1.msra.mxu0 %v1356
  %1412 = vmatprep.subr.mxu0 0.0
  %1413 = vmatpush1.msra.mxu0 %v1357
  %1414 = vmatprep.subr.mxu0 0.0
  %1415 = vmatpush1.msra.mxu0 %v1358
  %1416 = vmatprep.subr.mxu0 0.0
  %1417 = vmatpush1.msra.mxu0 %v1359
  %1418 = vmatprep.subr.mxu0 0.0
  %1419 = vmatpush1.msra.mxu0 %v1360
  %1420 = vmatprep.subr.mxu0 0.0
  %1421 = vmatpush1.msra.mxu0 %v1361
  %1422 = vmatprep.subr.mxu0 0.0
  %1423 = vmatpush1.msra.mxu0 %v1362
  %1424 = vmatprep.subr.mxu0 0.0
  %1425 = vmatpush1.msra.mxu0 %v1363
  %1426 = vmatprep.subr.mxu0 0.0
  %1427 = vmatpush1.msra.mxu0 %v1364
  %1428 = vmatprep.subr.mxu0 0.0
  %1429 = vmatpush1.msra.mxu0 %v1365
  %1430 = vmatprep.subr.mxu0 0.0
  %1431 = vmatpush1.msra.mxu0 %v1366
  %1432 = vmatprep.mubr.f32.mxu0 %v1332
  %1433 = vmatmul.mubr.f32.gmra.mrb[0].mxu0 %v1259
  %v1434 = vpop.f32.mrb[0].mxu0
  %v1435 = vadd.f32 %v1367, %v1434
  %v1436 = vpop.f32.mrb[0].mxu0
  %1437 = vdwg.mxu0
  %v1438 = vmax.f32 %v1435, 0.0
  %v1439 = vld [vmem:[%s2 + $0x20] sm:$0xff]
  %v1440 = vld [vmem:[%s2 + $0x58] sm:$0xff]
  %v1441 = vld [vmem:[%s2 + $0x90] sm:$0xff]
  %v1442 = vld [vmem:[%s2 + $0xc8] sm:$0xff]
  %v1443 = vld [vmem:[%s2 + $0x100] sm:$0xff]
  %v1444 = vld [vmem:[%s2 + $0x138] sm:$0xff]
  %v1445 = vld [vmem:[%s2 + $0x170] sm:$0xff]
  %v1446 = vld [vmem:[%s2 + $0x1a8] sm:$0xff]
  %v1447 = vld [vmem:[%s2 + $0x1e0] sm:$0xff]
  %v1448 = vld [vmem:[%s2 + $0x218] sm:$0xff]
  %v1449 = vld [vmem:[%s2 + $0x250] sm:$0xff]
  %v1450 = vld [vmem:[%s2 + $0x288] sm:$0xff]
  %v1451 = vld [vmem:[%s2 + $0x2c0] sm:$0xff]
  %v1452 = vld [vmem:[%s2 + $0x2f8] sm:$0xff]
  %v1453 = vld [vmem:[%s2 + $0x330] sm:$0xff]
  %v1454 = vld [vmem:[%s2 + $0x368] sm:$0xff]
  %v1455 = vld [vmem:[%s3 + $0x28] sm:$0xf]
  %1456 = vmatprep.subr.mxu0 0.0
  %1457 = vmatpush1.msra.mxu0 %v1439
  %1458 = vmatprep.subr.mxu0 0.0
  %1459 = vmatpush1.msra.mxu0 %v1440
  %1460 = vmatprep.subr.mxu0 0.0
  %1461 = vmatpush1.msra.mxu0 %v1441
  %1462 = vmatprep.subr.mxu0 0.0
  %1463 = vmatpush1.msra.mxu0 %v1442
  %1464 = vmatprep.subr.mxu0 0.0
  %1465 = vmatpush1.msra.mxu0 %v1443
  %1466 = vmatprep.subr.mxu0 0.0
  %1467 = vmatpush1.msra.mxu0 %v1444
  %1468 = vmatprep.subr.mxu0 0.0
  %1469 = vmatpush1.msra.mxu0 %v1445
  %1470 = vmatprep.subr.mxu0 0.0
  %1471 = vmatpush1.msra.mxu0 %v1446
  %1472 = vmatprep.subr.mxu0 0.0
  %1473 = vmatpush1.msra.mxu0 %v1447
  %1474 = vmatprep.subr.mxu0 0.0
  %1475 = vmatpush1.msra.mxu0 %v1448
  %1476 = vmatprep.subr.mxu0 0.0
  %1477 = vmatpush1.msra.mxu0 %v1449
  %1478 = vmatprep.subr.mxu0 0.0
  %1479 = vmatpush1.msra.mxu0 %v1450
  %1480 = vmatprep.subr.mxu0 0.0
  %1481 = vmatpush1.msra.mxu0 %v1451
  %1482 = vmatprep.subr.mxu0 0.0
  %1483 = vmatpush1.msra.mxu0 %v1452
  %1484 = vmatprep.subr.mxu0 0.0
  %1485 = vmatpush1.msra.mxu0 %v1453
  %1486 = vmatprep.subr.mxu0 0.0
  %1487 = vmatpush1.msra.mxu0 %v1454
  %1488 = vmatprep.subr.mxu0 0.0
  %1489 = vmatpush1.msra.mxu0 0.0
  %1490 = vmatprep.subr.mxu0 0.0
  %1491 = vmatpush1.msra.mxu0 0.0
  %1492 = vmatprep.subr.mxu0 0.0
  %1493 = vmatpush1.msra.mxu0 0.0
  %1494 = vmatprep.subr.mxu0 0.0
  %1495 = vmatpush1.msra.mxu0 0.0
  %1496 = vmatprep.subr.mxu0 0.0
  %1497 = vmatpush1.msra.mxu0 0.0
  %1498 = vmatprep.subr.mxu0 0.0
  %1499 = vmatpush1.msra.mxu0 0.0
  %1500 = vmatprep.subr.mxu0 0.0
  %1501 = vmatpush1.msra.mxu0 0.0
  %1502 = vmatprep.subr.mxu0 0.0
  %1503 = vmatpush1.msra.mxu0 0.0
  %1504 = vmatprep.subr.mxu0 0.0
  %1505 = vmatpush1.msra.mxu0 0.0
  %1506 = vmatprep.subr.mxu0 0.0
  %1507 = vmatpush1.msra.mxu0 0.0
  %1508 = vmatprep.subr.mxu0 0.0
  %1509 = vmatpush1.msra.mxu0 0.0
  %1510 = vmatprep.subr.mxu0 0.0
  %1511 = vmatpush1.msra.mxu0 0.0
  %1512 = vmatprep.subr.mxu0 0.0
  %1513 = vmatpush1.msra.mxu0 0.0
  %1514 = vmatprep.subr.mxu0 0.0
  %1515 = vmatpush1.msra.mxu0 0.0
  %1516 = vmatprep.subr.mxu0 0.0
  %1517 = vmatpush1.msra.mxu0 0.0
  %1518 = vmatprep.subr.mxu0 0.0
  %1519 = vmatpush1.msra.mxu0 0.0
  %1520 = vmatprep.mubr.f32.mxu0 0.0
  %1521 = vmatmul.mubr.f32.gmra.mrb[0].mxu0 %v1438
  %v1522 = vpop.f32.mrb[0].mxu0
  %v1523 = vadd.f32 %v1455, %v1522
  %v1524 = vpop.f32.mrb[0].mxu0
  %1525 = vdwg.mxu0
  %v1526 = vld [vmem:[%s2 + $0x28] sm:$0xff]
  %v1527 = vld [vmem:[%s2 + $0x60] sm:$0xff]
  %v1528 = vld [vmem:[%s2 + $0x98] sm:$0xff]
  %v1529 = vld [vmem:[%s2 + $0xd0] sm:$0xff]
  %v1530 = vld [vmem:[%s2 + $0x108] sm:$0xff]
  %v1531 = vld [vmem:[%s2 + $0x140] sm:$0xff]
  %v1532 = vld [vmem:[%s2 + $0x178] sm:$0xff]
  %v1533 = vld [vmem:[%s2 + $0x1b0] sm:$0xff]
  %v1534 = vld [vmem:[%s2 + $0x1e8] sm:$0xff]
  %v1535 = vld [vmem:[%s2 + $0x220] sm:$0xff]
  %v1536 = vld [vmem:[%s2 + $0x258] sm:$0xff]
  %v1537 = vld [vmem:[%s2 + $0x290] sm:$0xff]
  %v1538 = vld [vmem:[%s2 + $0x2c8] sm:$0xff]
  %v1539 = vld [vmem:[%s2 + $0x300] sm:$0xff]
  %v1540 = vld [vmem:[%s2 + $0x338] sm:$0xff]
  %v1541 = vld [vmem:[%s2 + $0x370] sm:$0xff]
  %v1542 = vld [vmem:[%s3 + $0x2c] sm:$0xf]
  %1543 = vmatprep.subr.mxu0 0.0
  %1544 = vmatpush1.msra.mxu0 %v1526
  %1545 = vmatprep.subr.mxu0 0.0
  %1546 = vmatpush1.msra.mxu0 %v1527
  %1547 = vmatprep.subr.mxu0 0.0
  %1548 = vmatpush1.msra.mxu0 %v1528
  %1549 = vmatprep.subr.mxu0 0.0
  %1550 = vmatpush1.msra.mxu0 %v1529
  %1551 = vmatprep.subr.mxu0 0.0
  %1552 = vmatpush1.msra.mxu0 %v1530
  %1553 = vmatprep.subr.mxu0 0.0
  %1554 = vmatpush1.msra.mxu0 %v1531
  %1555 = vmatprep.subr.mxu0 0.0
  %1556 = vmatpush1.msra.mxu0 %v1532
  %1557 = vmatprep.subr.mxu0 0.0
  %1558 = vmatpush1.msra.mxu0 %v1533
  %1559 = vmatprep.subr.mxu0 0.0
  %1560 = vmatpush1.msra.mxu0 %v1534
  %1561 = vmatprep.subr.mxu0 0.0
  %1562 = vmatpush1.msra.mxu0 %v1535
  %1563 = vmatprep.subr.mxu0 0.0
  %1564 = vmatpush1.msra.mxu0 %v1536
  %1565 = vmatprep.subr.mxu0 0.0
  %1566 = vmatpush1.msra.mxu0 %v1537
  %1567 = vmatprep.subr.mxu0 0.0
  %1568 = vmatpush1.msra.mxu0 %v1538
  %1569 = vmatprep.subr.mxu0 0.0
  %1570 = vmatpush1.msra.mxu0 %v1539
  %1571 = vmatprep.subr.mxu0 0.0
  %1572 = vmatpush1.msra.mxu0 %v1540
  %1573 = vmatprep.subr.mxu0 0.0
  %1574 = vmatpush1.msra.mxu0 %v1541
  %1575 = vmatprep.subr.mxu0 0.0
  %1576 = vmatpush1.msra.mxu0 0.0
  %1577 = vmatprep.subr.mxu0 0.0
  %1578 = vmatpush1.msra.mxu0 0.0
  %1579 = vmatprep.subr.mxu0 0.0
  %1580 = vmatpush1.msra.mxu0 0.0
  %1581 = vmatprep.subr.mxu0 0.0
  %1582 = vmatpush1.msra.mxu0 0.0
  %1583 = vmatprep.subr.mxu0 0.0
  %1584 = vmatpush1.msra.mxu0 0.0
  %1585 = vmatprep.subr.mxu0 0.0
  %1586 = vmatpush1.msra.mxu0 0.0
  %1587 = vmatprep.subr.mxu0 0.0
  %1588 = vmatpush1.msra.mxu0 0.0
  %1589 = vmatprep.subr.mxu0 0.0
  %1590 = vmatpush1.msra.mxu0 0.0
  %1591 = vmatprep.subr.mxu0 0.0
  %1592 = vmatpush1.msra.mxu0 0.0
  %1593 = vmatprep.subr.mxu0 0.0
  %1594 = vmatpush1.msra.mxu0 0.0
  %1595 = vmatprep.subr.mxu0 0.0
  %1596 = vmatpush1.msra.mxu0 0.0
  %1597 = vmatprep.subr.mxu0 0.0
  %1598 = vmatpush1.msra.mxu0 0.0
  %1599 = vmatprep.subr.mxu0 0.0
  %1600 = vmatpush1.msra.mxu0 0.0
  %1601 = vmatprep.subr.mxu0 0.0
  %1602 = vmatpush1.msra.mxu0 0.0
  %1603 = vmatprep.subr.mxu0 0.0
  %1604 = vmatpush1.msra.mxu0 0.0
  %1605 = vmatprep.subr.mxu0 0.0
  %1606 = vmatpush1.msra.mxu0 0.0
  %1607 = vmatprep.mubr.f32.mxu0 0.0
  %1608 = vmatmul.mubr.f32.gmra.mrb[0].mxu0 %v1523
  %v1609 = vpop.f32.mrb[0].mxu0
  %v1610 = vadd.f32 %v1542, %v1609
  %v1611 = vpop.f32.mrb[0].mxu0
  %1612 = vdwg.mxu0
  %vm1613 = vcmp.eq.s32.totalorder %v720, 5
  %v1614 = vsel %vm1613, 1, 0
  %vm1615 = vcmp.eq.s32.totalorder %v1614, 1
  %v1616 = vsel %vm1615, %v717, 0.0
  %v1617 = vadd.f32 %v1610, %v1616
  %1618 = vst [vmem:[%s4] sm:$0xf] %v1617
  // Predicated region
  $region18: #{model_forward.1} parent=0 // pred_check
    _
  $region19: #{model_forward.1} parent=0 // pred_check_branch
    %1620 = sbr.rel (0) target = $region21
  $region20: #{model_forward.1} parent=0 // pred_region
    _
  $region21: #{model_forward.1} parent=0 // pred_fallthru
    _
  // Predicated region
  $region22: #{model_forward.1} parent=0 // pred_check
    _
  $region23: #{model_forward.1} parent=0 // pred_check_branch
    %1622 = sbr.rel (0) target = $region25
  $region24: #{model_forward.1} parent=0 // pred_region
    _
  $region25: #{model_forward.1} parent=0 // pred_fallthru
    _

</llo_original>
